<compile_context>
chip_gen: v6e
topology: v6e:2x2x1
jax: 0.10.0
libtpu: 0.0.40
codegen_flags: <defaults>
</compile_context>

<pallas_src>
import math
from functools import partial

import jax
import jax.numpy as jnp
from jax.experimental import pallas as pl
from jax.experimental.pallas import tpu as pltpu


_SCORE_LANES = 128           # per-head score columns live in their own 128-lane group
_NEG_INF = -100000000.0      # identical constant to the PyTorch reference


def _round_up(v, m):
    return ((v + m - 1) // m) * m


def _matmul_pad_multiple():
    """Lane-padding target for matmul N-dims: 256 on the 2x256^2-MXU chips
    (v6e / v7x / Trillium), 128 on v5e (4x128^2)."""
    try:
        kind = jax.devices()[0].device_kind.lower()
    except Exception:
        return 128
    if any(tag in kind for tag in ("v6", "v7", "trillium")):
        return 256
    return 128


def _vmem_limits():
    """Return (explicit scoped-VMEM limit, usable budget for tile sizing) bytes."""
    try:
        cap = int(pltpu.get_tpu_info().vmem_capacity_bytes)
    except Exception:
        cap = 64 << 20                        # v7x-safe lower bound
    limit = max(32 << 20, (cap * 3) // 4)     # leave physical headroom
    budget = (limit * 4) // 5                 # headroom for compiler temporaries
    return limit, budget


def _choose_tb(batch, per_elem_bytes, fixed_bytes, budget_bytes, target=512):
    """Largest 8-aligned batch tile that divides B, fits the VMEM budget and
    (when possible) leaves >= 2 grid steps so the 'parallel' axis can be split
    across both TensorCores on v7x."""
    avail = max(budget_bytes - fixed_bytes, 8 * per_elem_bytes)
    cap = min(target, max(8, avail // max(per_elem_bytes, 1)))
    best_multi = best_any = None
    for t in range(8, batch + 1, 8):
        if batch % t or t > cap:
            continue
        best_any = t
        if batch // t >= 2:
            best_multi = t
    if best_multi is not None:
        return best_multi
    if best_any is not None:
        return best_any
    return batch                               # tiny / oddly-sized batch: one step


def _attention_pooling_kernel(*refs, has_mask):
    if has_mask:
        x_ref, mask_ref, wproj_ref, expand_ref, wo_ref, o_ref = refs
    else:
        x_ref, wproj_ref, expand_ref, wo_ref, o_ref = refs
        mask_ref = None

    tb, n, e_pad = x_ref.shape
    score_lanes, nhd_pad = expand_ref.shape

    # One fused, lane-dense projection on the MXU:
    #   lanes [0, nhd_pad)                     -> V for all heads (zero-padded)
    #   lanes [nhd_pad, nhd_pad + score_lanes) -> per-head scores (q folded into w_k)
    x2 = x_ref[...].reshape(tb * n, e_pad)                   # leading-dim merge only
    proj = jnp.dot(x2, wproj_ref[...],
                   preferred_element_type=jnp.float32)       # [tb*n, nhd_pad+128]

    v2 = proj[:, :nhd_pad]                                   # 128-aligned lane slice
    s3 = proj[:, nhd_pad:].reshape(tb, n, score_lanes)       # 128-aligned lane slice

    if has_mask:
        # Exact PyTorch blend (handles fractional masks too): s*m + (-1e8)*(1-m).
        m3 = mask_ref[...]                                   # [tb, n, 1]
        s3 = s3 * m3 + jnp.float32(_NEG_INF) * (1.0 - m3)

    # Numerically-stable softmax over the sequence axis (axis=1), kept in f32.
    # TODO(synk): for very large N, lay scores out as [tb, NH, N] (N on lanes)
    # so the exp/max/sum are lane-dense; negligible at small N.
    s3 = s3 - jnp.max(s3, axis=1, keepdims=True)
    e3 = jnp.exp(s3)
    p3 = e3 * pl.reciprocal(jnp.sum(e3, axis=1, keepdims=True), approx=False)

    # Expand per-head probabilities onto the NH*D value lanes with a constant
    # 0/1 matmul (MXU), then one fused VPU multiply + sublane (XLU) reduce.
    p2 = p3.reshape(tb * n, score_lanes).astype(expand_ref.dtype)
    p_full = jnp.dot(p2, expand_ref[...],
                     preferred_element_type=jnp.float32)     # [tb*n, nhd_pad]
    att = jnp.sum((p_full * v2).reshape(tb, n, nhd_pad), axis=1)   # [tb, nhd_pad]

    # Fused output projection for all heads; lane-dense [tb, E_pad] store.
    o_ref[...] = jnp.dot(att.astype(wo_ref.dtype), wo_ref[...],
                         preferred_element_type=jnp.float32).astype(o_ref.dtype)


def attention_pooling(x, w_k, w_v, q, w_o, mask=None, *, tb=None,
                      compute_dtype=jnp.bfloat16):
    """Pallas AttentionPooling forward. x: [B, N, E] -> [B, E].

    compute_dtype feeds the MXU matmuls (bf16 = fast path on all chips; pass
    jnp.float32 for tight-tolerance validation). Softmax / p.V stay in f32.
    """
    B, N, E = x.shape
    NH, _, D = w_k.shape
    NHD = NH * D
    f32 = jnp.float32

    lane = _matmul_pad_multiple()
    E_pad = _round_up(E, lane)
    NHD_pad = _round_up(NHD, lane)

    # ---- host-side parameter refactoring (forward-equivalent; tiny arrays,
    #      would be prepared once per module in a real deployment) -----------
    # score[b,l,h] = (x[b,l] @ w_k[h]) . q[h] / sqrt(D) = x[b,l] @ w_score[:,h]
    w_score = jnp.einsum('njd,nd->jn', w_k.astype(f32),
                         q[:, 0, :].astype(f32)) / math.sqrt(D)        # [E, NH]
    w_v_flat = jnp.transpose(w_v.astype(f32), (1, 0, 2)).reshape(E, NHD)

    w_proj = jnp.zeros((E_pad, NHD_pad + _SCORE_LANES), f32)
    w_proj = w_proj.at[:E, :NHD].set(w_v_flat)
    w_proj = w_proj.at[:E, NHD_pad:NHD_pad + NH].set(w_score)
    w_proj = w_proj.astype(compute_dtype)

    # Constant 0/1 expansion: score lane h -> value lanes [h*D, (h+1)*D).
    expand = jnp.zeros((_SCORE_LANES, NHD_pad), f32)
    for h in range(NH):
        expand = expand.at[h, h * D:(h + 1) * D].set(1.0)
    expand = expand.astype(compute_dtype)

    w_o_pad = jnp.zeros((NHD_pad, E_pad), f32)
    w_o_pad = w_o_pad.at[:NHD, :E].set(w_o.astype(f32).reshape(NHD, E))
    w_o_pad = w_o_pad.astype(compute_dtype)

    # x: pad the embed dim to the lane multiple, cast to the matmul dtype.
    x_in = x
    if E_pad != E:
        x_in = jnp.pad(x_in, ((0, 0), (0, 0), (0, E_pad - E)))
    x_in = x_in.astype(compute_dtype)

    has_mask = mask is not None
    if has_mask:
        # [B, 1, N] -> [B, N, 1] so the sequence axis lines up with scores.
        # TODO(synk): for very large N on v7x pass the mask lane-dense as [B, N]
        # (the (tb, N, 1) block lane-pads to 128 in VMEM); needs an in-kernel
        # relayout before broadcasting, so the proven layout is kept here and
        # the lane-padded size is charged to the VMEM budget below instead.
        mask_in = jnp.transpose(mask.astype(f32), (0, 2, 1))           # [B, N, 1]

    # ---- VMEM-budget- and chip-aware batch tile ----------------------------
    vmem_limit, vmem_budget = _vmem_limits()
    c_item = jnp.dtype(compute_dtype).itemsize
    o_item = jnp.dtype(x.dtype).itemsize
    per_elem = (2 * N * E_pad * c_item               # x (double-buffered)
                + 2 * E_pad * o_item                 # out (double-buffered)
                + N * (NHD_pad + _SCORE_LANES) * 4   # proj (f32 temporary)
                + 2 * N * NHD_pad * 4                # p-expand + p*V (f32 temps)
                + 3 * N * _SCORE_LANES * 4)          # softmax temporaries (f32)
    if has_mask:
        per_elem += 2 * N * 128 * 4                  # mask block lane-pads to 128
    fixed = 2 * c_item * (E_pad * (NHD_pad + _SCORE_LANES)
                          + _SCORE_LANES * NHD_pad + NHD_pad * E_pad)

    if tb is None:
        tb = _choose_tb(B, per_elem, fixed, vmem_budget)
    assert B % tb == 0, f"batch {B} must be divisible by batch tile {tb}"
    assert tb == B or tb % 8 == 0, "batch tile must be 8-aligned or the full batch"
    grid = (B // tb,)

    kernel = partial(_attention_pooling_kernel, has_mask=has_mask)

    def _call(single_buffer_weights):
        # Grid-invariant weight blocks only need a single VMEM buffer.
        w_mode = {"pipeline_mode": pl.Buffered(1)} if single_buffer_weights else {}
        in_specs = [pl.BlockSpec((tb, N, E_pad), lambda b: (b, 0, 0))]   # x
        args = [x_in]
        if has_mask:
            in_specs.append(pl.BlockSpec((tb, N, 1), lambda b: (b, 0, 0)))
            args.append(mask_in)
        in_specs += [
            pl.BlockSpec((E_pad, NHD_pad + _SCORE_LANES), lambda b: (0, 0), **w_mode),
            pl.BlockSpec((_SCORE_LANES, NHD_pad), lambda b: (0, 0), **w_mode),
            pl.BlockSpec((NHD_pad, E_pad), lambda b: (0, 0), **w_mode),
        ]
        args += [w_proj, expand, w_o_pad]
        return pl.pallas_call(
            kernel,
            out_shape=jax.ShapeDtypeStruct((B, E_pad), x.dtype),
            grid_spec=pltpu.PrefetchScalarGridSpec(
                num_scalar_prefetch=0,
                grid=grid,
                in_specs=in_specs,
                out_specs=pl.BlockSpec((tb, E_pad), lambda b: (b, 0)),
            ),
            compiler_params=pltpu.CompilerParams(
                dimension_semantics=("parallel",),   # batch tiles -> both TCs on v7x
                vmem_limit_bytes=vmem_limit,
            ),
        )(*args)

    try:
        out_pad = _call(True)
    except Exception:
        # pl.Buffered(1) not supported on this jax version -> default buffering.
        out_pad = _call(False)

    return out_pad[:, :E]


def _xavier_normal(key, shape):
    # PyTorch xavier_normal_ for a 3D tensor [n0, n1, n2]:
    # fan_out = n0 * n2, fan_in = n1 * n2  (dims[2:] are "receptive field")
    n0, n1, n2 = shape
    fan_in = n1 * n2
    fan_out = n0 * n2
    std = math.sqrt(2.0 / (fan_in + fan_out))
    return std * jax.random.normal(key, shape, dtype=jnp.float32)


def _reference(x, w_k, w_v, q, w_o, mask=None):
    # Pure-JAX reference mirroring the PyTorch forward exactly (f32).
    k = jnp.einsum('blj,njd->bnld', x, w_k)
    v = jnp.einsum('blj,njd->bnld', x, w_v)
    score = jnp.einsum('nij,bnkj->bnik', q, k) / math.sqrt(q.shape[-1])
    if mask is not None:
        m = mask[:, None]
        score = score * m + _NEG_INF * (1 - m)
    score = jax.nn.softmax(score, axis=-1)
    out = jnp.einsum('bnij,bnjk->bnik', score, v)
    out = jnp.einsum('bnlj,njk->blk', out, w_o)
    return out[:, 0]


if __name__ == "__main__":
    NH, D = 4, 16               # num_heads, latent_dim
    E = 32                      # embed_dim
    B, N = 16, 8                # batch, seq length

    key = jax.random.PRNGKey(0)
    kx, kk, kv, kq, ko = jax.random.split(key, 5)

    x = jax.random.normal(kx, (B, N, E), dtype=jnp.float32)
    w_k = _xavier_normal(kk, (NH, E, D))
    w_v = _xavier_normal(kv, (NH, E, D))
    q = _xavier_normal(kq, (NH, 1, D))
    w_o = _xavier_normal(ko, (NH, D, E))

    # Non-trivial mask: some positions masked out in two batch elements.
    mask = jnp.ones((B, 1, N), dtype=jnp.float32)
    mask = mask.at[1, 0, -2:].set(0.0).at[5, 0, :3].set(0.0)

    ref_m = _reference(x, w_k, w_v, q, w_o, mask)
    ref_n = _reference(x, w_k, w_v, q, w_o, None)

    # 1) Default fast path (bf16 MXU matmuls), masked, auto VMEM-aware tile
    #    (-> TB=8, 2 grid steps). bf16 tolerance per review note.
    out_bf16 = jax.block_until_ready(attention_pooling(x, w_k, w_v, q, w_o, mask))
    assert out_bf16.shape == (B, E)
    assert jnp.allclose(out_bf16, ref_m, atol=3e-2, rtol=3e-2), (
        f"bf16 masked: max err {jnp.max(jnp.abs(out_bf16 - ref_m))}")

    # 2) f32 validation path, masked, forced 2-step batch-blocked grid.
    out_f32 = jax.block_until_ready(
        attention_pooling(x, w_k, w_v, q, w_o, mask, tb=8,
                          compute_dtype=jnp.float32))
    assert jnp.allclose(out_f32, ref_m, atol=1e-5, rtol=1e-5), (
        f"f32 masked: max err {jnp.max(jnp.abs(out_f32 - ref_m))}")

    # 3) f32 validation path, mask=None (no mask DMA / no mask math).
    out_nom = jax.block_until_ready(
        attention_pooling(x, w_k, w_v, q, w_o, None, compute_dtype=jnp.float32))
    assert jnp.allclose(out_nom, ref_n, atol=1e-5, rtol=1e-5), (
        f"f32 no-mask: max err {jnp.max(jnp.abs(out_nom - ref_n))}")

    print("KERNEL_OK")
</pallas_src>

<mosaic_0001>
module attributes {stable_mosaic.version = 11 : i64} {
  func.func @_attention_pooling_kernel(%arg0: i32, %arg1: memref<8x8x128xbf16, #tpu.memory_space<vmem>>, %arg2: memref<8x8x1xf32, #tpu.memory_space<vmem>>, %arg3: memref<128x256xbf16, #tpu.memory_space<vmem>>, %arg4: memref<128x128xbf16, #tpu.memory_space<vmem>>, %arg5: memref<128x128xbf16, #tpu.memory_space<vmem>>, %arg6: memref<8x128xf32, #tpu.memory_space<vmem>>) attributes {dimension_semantics = [#tpu.dimension_semantics<parallel>], iteration_bounds = array<i64: 2>, scalar_prefetch = 0 : i64, scratch_operands = 0 : i64, tpu.core_type = #tpu.core_type<tc>, window_params = [{transform_indices = @transform_0, window_bounds = array<i64: 8, 8, 128>}, {transform_indices = @transform_1, window_bounds = array<i64: 8, 8, 1>}, {pipeline_mode = #tpu.pipeline_mode<synchronous>, transform_indices = @transform_2, window_bounds = array<i64: 128, 256>}, {pipeline_mode = #tpu.pipeline_mode<synchronous>, transform_indices = @transform_3, window_bounds = array<i64: 128, 128>}, {pipeline_mode = #tpu.pipeline_mode<synchronous>, transform_indices = @transform_4, window_bounds = array<i64: 128, 128>}, {transform_indices = @transform_5, window_bounds = array<i64: 8, 128>}]} {
    %c0 = arith.constant 0 : index
    %c0_0 = arith.constant 0 : index
    %c0_1 = arith.constant 0 : index
    %0 = vector.load %arg1[%c0, %c0_0, %c0_1] : memref<8x8x128xbf16, #tpu.memory_space<vmem>>, vector<8x8x128xbf16>
    %1 = vector.shape_cast %0 : vector<8x8x128xbf16> to vector<64x128xbf16>
    %c0_2 = arith.constant 0 : index
    %c0_3 = arith.constant 0 : index
    %2 = vector.load %arg3[%c0_2, %c0_3] : memref<128x256xbf16, #tpu.memory_space<vmem>>, vector<128x256xbf16>
    %cst = arith.constant dense<0.000000e+00> : vector<64x256xf32>
    %3 = tpu.matmul %1, %2, %cst {dimension_numbers = #tpu.dot_dimension_numbers<[1], [0], [0], [1], [0, 0, 1, 1], [], []>} : vector<64x128xbf16>, vector<128x256xbf16>, vector<64x256xf32> -> vector<64x256xf32>
    %4 = vector.extract_strided_slice %3 {offsets = [0, 0], sizes = [64, 128], strides = [1, 1]} : vector<64x256xf32> to vector<64x128xf32>
    %5 = vector.extract_strided_slice %3 {offsets = [0, 128], sizes = [64, 128], strides = [1, 1]} : vector<64x256xf32> to vector<64x128xf32>
    %6 = vector.shape_cast %5 : vector<64x128xf32> to vector<8x8x128xf32>
    %c0_4 = arith.constant 0 : index
    %c0_5 = arith.constant 0 : index
    %c0_6 = arith.constant 0 : index
    %7 = vector.load %arg2[%c0_4, %c0_5, %c0_6] : memref<8x8x1xf32, #tpu.memory_space<vmem>>, vector<8x8x1xf32>
    %8 = vector.broadcast %7 : vector<8x8x1xf32> to vector<8x8x128xf32>
    %9 = arith.mulf %6, %8 : vector<8x8x128xf32>
    %cst_7 = arith.constant 1.000000e+00 : f32
    %10 = vector.broadcast %cst_7 : f32 to vector<8x8x1xf32>
    %11 = arith.subf %10, %7 : vector<8x8x1xf32>
    %cst_8 = arith.constant -1.000000e+08 : f32
    %12 = vector.broadcast %cst_8 : f32 to vector<8x8x1xf32>
    %13 = arith.mulf %12, %11 : vector<8x8x1xf32>
    %14 = vector.broadcast %13 : vector<8x8x1xf32> to vector<8x8x128xf32>
    %15 = arith.addf %9, %14 : vector<8x8x128xf32>
    %cst_9 = arith.constant dense<0xFF800000> : vector<8x128xf32>
    %16 = vector.multi_reduction <maximumf>, %15, %cst_9 [1] : vector<8x8x128xf32> to vector<8x128xf32>
    %17 = vector.shape_cast %16 : vector<8x128xf32> to vector<8x1x128xf32>
    %18 = vector.broadcast %17 : vector<8x1x128xf32> to vector<8x8x128xf32>
    %19 = arith.subf %15, %18 : vector<8x8x128xf32>
    %20 = math.exp %19 : vector<8x8x128xf32>
    %cst_10 = arith.constant dense<0.000000e+00> : vector<8x128xf32>
    %21 = vector.multi_reduction <add>, %20, %cst_10 [1] : vector<8x8x128xf32> to vector<8x128xf32>
    %22 = vector.shape_cast %21 : vector<8x128xf32> to vector<8x1x128xf32>
    %23 = tpu.reciprocal %22 : vector<8x1x128xf32> -> vector<8x1x128xf32>
    %24 = vector.broadcast %23 : vector<8x1x128xf32> to vector<8x8x128xf32>
    %25 = arith.mulf %20, %24 : vector<8x8x128xf32>
    %26 = vector.shape_cast %25 : vector<8x8x128xf32> to vector<64x128xf32>
    %27 = arith.truncf %26 : vector<64x128xf32> to vector<64x128xbf16>
    %c0_11 = arith.constant 0 : index
    %c0_12 = arith.constant 0 : index
    %28 = vector.load %arg4[%c0_11, %c0_12] : memref<128x128xbf16, #tpu.memory_space<vmem>>, vector<128x128xbf16>
    %cst_13 = arith.constant dense<0.000000e+00> : vector<64x128xf32>
    %29 = tpu.matmul %27, %28, %cst_13 {dimension_numbers = #tpu.dot_dimension_numbers<[1], [0], [0], [1], [0, 0, 1, 1], [], []>} : vector<64x128xbf16>, vector<128x128xbf16>, vector<64x128xf32> -> vector<64x128xf32>
    %30 = arith.mulf %29, %4 : vector<64x128xf32>
    %31 = vector.shape_cast %30 : vector<64x128xf32> to vector<8x8x128xf32>
    %cst_14 = arith.constant dense<0.000000e+00> : vector<8x128xf32>
    %32 = vector.multi_reduction <add>, %31, %cst_14 [1] : vector<8x8x128xf32> to vector<8x128xf32>
    %33 = arith.truncf %32 : vector<8x128xf32> to vector<8x128xbf16>
    %c0_15 = arith.constant 0 : index
    %c0_16 = arith.constant 0 : index
    %34 = vector.load %arg5[%c0_15, %c0_16] : memref<128x128xbf16, #tpu.memory_space<vmem>>, vector<128x128xbf16>
    %cst_17 = arith.constant dense<0.000000e+00> : vector<8x128xf32>
    %35 = tpu.matmul %33, %34, %cst_17 {dimension_numbers = #tpu.dot_dimension_numbers<[1], [0], [0], [1], [0, 0, 1, 1], [], []>} : vector<8x128xbf16>, vector<128x128xbf16>, vector<8x128xf32> -> vector<8x128xf32>
    %c0_18 = arith.constant 0 : index
    %c0_19 = arith.constant 0 : index
    %36 = vector.load %arg6[%c0_18, %c0_19] : memref<8x128xf32, #tpu.memory_space<vmem>>, vector<8x128xf32>
    tpu.vector_store %arg6[%c0_18, %c0_19], %35 {strides = array<i32>} : memref<8x128xf32, #tpu.memory_space<vmem>>, vector<8x128xf32>,
    return
  }
  func.func @transform_0(%arg0: i32) -> (i32, i32, i32) {
    %c0_i32 = arith.constant 0 : i32
    %c0_i32_0 = arith.constant 0 : i32
    %c0_i32_1 = arith.constant 0 : i32
    return %arg0, %c0_i32, %c0_i32_0 : i32, i32, i32
  }
  func.func @transform_1(%arg0: i32) -> (i32, i32, i32) {
    %c0_i32 = arith.constant 0 : i32
    %c0_i32_0 = arith.constant 0 : i32
    %c0_i32_1 = arith.constant 0 : i32
    return %arg0, %c0_i32, %c0_i32_0 : i32, i32, i32
  }
  func.func @transform_2(%arg0: i32) -> (i32, i32) {
    %c0_i32 = arith.constant 0 : i32
    %c0_i32_0 = arith.constant 0 : i32
    %c0_i32_1 = arith.constant 0 : i32
    return %c0_i32, %c0_i32_0 : i32, i32
  }
  func.func @transform_3(%arg0: i32) -> (i32, i32) {
    %c0_i32 = arith.constant 0 : i32
    %c0_i32_0 = arith.constant 0 : i32
    %c0_i32_1 = arith.constant 0 : i32
    return %c0_i32, %c0_i32_0 : i32, i32
  }
  func.func @transform_4(%arg0: i32) -> (i32, i32) {
    %c0_i32 = arith.constant 0 : i32
    %c0_i32_0 = arith.constant 0 : i32
    %c0_i32_1 = arith.constant 0 : i32
    return %c0_i32, %c0_i32_0 : i32, i32
  }
  func.func @transform_5(%arg0: i32) -> (i32, i32) {
    %c0_i32 = arith.constant 0 : i32
    %c0_i32_0 = arith.constant 0 : i32
    return %arg0, %c0_i32 : i32, i32
  }
}

module attributes {stable_mosaic.version = 11 : i64} {
  func.func @_attention_pooling_kernel(%arg0: i32, %arg1: memref<8x8x128xbf16, #tpu.memory_space<vmem>>, %arg2: memref<8x8x1xf32, #tpu.memory_space<vmem>>, %arg3: memref<128x256xbf16, #tpu.memory_space<vmem>>, %arg4: memref<128x128xbf16, #tpu.memory_space<vmem>>, %arg5: memref<128x128xbf16, #tpu.memory_space<vmem>>, %arg6: memref<8x128xf32, #tpu.memory_space<vmem>>) attributes {dimension_semantics = [#tpu.dimension_semantics<parallel>], iteration_bounds = array<i64: 2>, scalar_prefetch = 0 : i64, scratch_operands = 0 : i64, tpu.core_type = #tpu.core_type<tc>, window_params = [{transform_indices = @transform_0, window_bounds = array<i64: 8, 8, 128>}, {transform_indices = @transform_1, window_bounds = array<i64: 8, 8, 1>}, {pipeline_mode = #tpu.pipeline_mode<synchronous>, transform_indices = @transform_2, window_bounds = array<i64: 128, 256>}, {pipeline_mode = #tpu.pipeline_mode<synchronous>, transform_indices = @transform_3, window_bounds = array<i64: 128, 128>}, {pipeline_mode = #tpu.pipeline_mode<synchronous>, transform_indices = @transform_4, window_bounds = array<i64: 128, 128>}, {transform_indices = @transform_5, window_bounds = array<i64: 8, 128>}]} {
    %c0 = arith.constant 0 : index
    %c0_0 = arith.constant 0 : index
    %c0_1 = arith.constant 0 : index
    %0 = vector.load %arg1[%c0, %c0_0, %c0_1] : memref<8x8x128xbf16, #tpu.memory_space<vmem>>, vector<8x8x128xbf16>
    %1 = vector.shape_cast %0 : vector<8x8x128xbf16> to vector<64x128xbf16>
    %c0_2 = arith.constant 0 : index
    %c0_3 = arith.constant 0 : index
    %2 = vector.load %arg3[%c0_2, %c0_3] : memref<128x256xbf16, #tpu.memory_space<vmem>>, vector<128x256xbf16>
    %cst = arith.constant dense<0.000000e+00> : vector<64x256xf32>
    %3 = tpu.matmul %1, %2, %cst {dimension_numbers = #tpu.dot_dimension_numbers<[1], [0], [0], [1], [0, 0, 1, 1], [], []>} : vector<64x128xbf16>, vector<128x256xbf16>, vector<64x256xf32> -> vector<64x256xf32>
    %4 = vector.extract_strided_slice %3 {offsets = [0, 0], sizes = [64, 128], strides = [1, 1]} : vector<64x256xf32> to vector<64x128xf32>
    %5 = vector.extract_strided_slice %3 {offsets = [0, 128], sizes = [64, 128], strides = [1, 1]} : vector<64x256xf32> to vector<64x128xf32>
    %6 = vector.shape_cast %5 : vector<64x128xf32> to vector<8x8x128xf32>
    %c0_4 = arith.constant 0 : index
    %c0_5 = arith.constant 0 : index
    %c0_6 = arith.constant 0 : index
    %7 = vector.load %arg2[%c0_4, %c0_5, %c0_6] : memref<8x8x1xf32, #tpu.memory_space<vmem>>, vector<8x8x1xf32>
    %8 = vector.broadcast %7 : vector<8x8x1xf32> to vector<8x8x128xf32>
    %9 = arith.mulf %6, %8 : vector<8x8x128xf32>
    %cst_7 = arith.constant 1.000000e+00 : f32
    %10 = vector.broadcast %cst_7 : f32 to vector<8x8x1xf32>
    %11 = arith.subf %10, %7 : vector<8x8x1xf32>
    %cst_8 = arith.constant -1.000000e+08 : f32
    %12 = vector.broadcast %cst_8 : f32 to vector<8x8x1xf32>
    %13 = arith.mulf %12, %11 : vector<8x8x1xf32>
    %14 = vector.broadcast %13 : vector<8x8x1xf32> to vector<8x8x128xf32>
    %15 = arith.addf %9, %14 : vector<8x8x128xf32>
    %cst_9 = arith.constant dense<0xFF800000> : vector<8x128xf32>
    %16 = vector.multi_reduction <maximumf>, %15, %cst_9 [1] : vector<8x8x128xf32> to vector<8x128xf32>
    %17 = vector.shape_cast %16 : vector<8x128xf32> to vector<8x1x128xf32>
    %18 = vector.broadcast %17 : vector<8x1x128xf32> to vector<8x8x128xf32>
    %19 = arith.subf %15, %18 : vector<8x8x128xf32>
    %20 = math.exp %19 : vector<8x8x128xf32>
    %cst_10 = arith.constant dense<0.000000e+00> : vector<8x128xf32>
    %21 = vector.multi_reduction <add>, %20, %cst_10 [1] : vector<8x8x128xf32> to vector<8x128xf32>
    %22 = vector.shape_cast %21 : vector<8x128xf32> to vector<8x1x128xf32>
    %23 = tpu.reciprocal %22 : vector<8x1x128xf32> -> vector<8x1x128xf32>
    %24 = vector.broadcast %23 : vector<8x1x128xf32> to vector<8x8x128xf32>
    %25 = arith.mulf %20, %24 : vector<8x8x128xf32>
    %26 = vector.shape_cast %25 : vector<8x8x128xf32> to vector<64x128xf32>
    %27 = arith.truncf %26 : vector<64x128xf32> to vector<64x128xbf16>
    %c0_11 = arith.constant 0 : index
    %c0_12 = arith.constant 0 : index
    %28 = vector.load %arg4[%c0_11, %c0_12] : memref<128x128xbf16, #tpu.memory_space<vmem>>, vector<128x128xbf16>
    %cst_13 = arith.constant dense<0.000000e+00> : vector<64x128xf32>
    %29 = tpu.matmul %27, %28, %cst_13 {dimension_numbers = #tpu.dot_dimension_numbers<[1], [0], [0], [1], [0, 0, 1, 1], [], []>} : vector<64x128xbf16>, vector<128x128xbf16>, vector<64x128xf32> -> vector<64x128xf32>
    %30 = arith.mulf %29, %4 : vector<64x128xf32>
    %31 = vector.shape_cast %30 : vector<64x128xf32> to vector<8x8x128xf32>
    %cst_14 = arith.constant dense<0.000000e+00> : vector<8x128xf32>
    %32 = vector.multi_reduction <add>, %31, %cst_14 [1] : vector<8x8x128xf32> to vector<8x128xf32>
    %33 = arith.truncf %32 : vector<8x128xf32> to vector<8x128xbf16>
    %c0_15 = arith.constant 0 : index
    %c0_16 = arith.constant 0 : index
    %34 = vector.load %arg5[%c0_15, %c0_16] : memref<128x128xbf16, #tpu.memory_space<vmem>>, vector<128x128xbf16>
    %cst_17 = arith.constant dense<0.000000e+00> : vector<8x128xf32>
    %35 = tpu.matmul %33, %34, %cst_17 {dimension_numbers = #tpu.dot_dimension_numbers<[1], [0], [0], [1], [0, 0, 1, 1], [], []>} : vector<8x128xbf16>, vector<128x128xbf16>, vector<8x128xf32> -> vector<8x128xf32>
    %c0_18 = arith.constant 0 : index
    %c0_19 = arith.constant 0 : index
    %36 = vector.load %arg6[%c0_18, %c0_19] : memref<8x128xf32, #tpu.memory_space<vmem>>, vector<8x128xf32>
    tpu.vector_store %arg6[%c0_18, %c0_19], %35 {strides = array<i32>} : memref<8x128xf32, #tpu.memory_space<vmem>>, vector<8x128xf32>,
    return
  }
  func.func @transform_0(%arg0: i32) -> (i32, i32, i32) {
    %c0_i32 = arith.constant 0 : i32
    %c0_i32_0 = arith.constant 0 : i32
    %c0_i32_1 = arith.constant 0 : i32
    return %arg0, %c0_i32, %c0_i32_0 : i32, i32, i32
  }
  func.func @transform_1(%arg0: i32) -> (i32, i32, i32) {
    %c0_i32 = arith.constant 0 : i32
    %c0_i32_0 = arith.constant 0 : i32
    %c0_i32_1 = arith.constant 0 : i32
    return %arg0, %c0_i32, %c0_i32_0 : i32, i32, i32
  }
  func.func @transform_2(%arg0: i32) -> (i32, i32) {
    %c0_i32 = arith.constant 0 : i32
    %c0_i32_0 = arith.constant 0 : i32
    %c0_i32_1 = arith.constant 0 : i32
    return %c0_i32, %c0_i32_0 : i32, i32
  }
  func.func @transform_3(%arg0: i32) -> (i32, i32) {
    %c0_i32 = arith.constant 0 : i32
    %c0_i32_0 = arith.constant 0 : i32
    %c0_i32_1 = arith.constant 0 : i32
    return %c0_i32, %c0_i32_0 : i32, i32
  }
  func.func @transform_4(%arg0: i32) -> (i32, i32) {
    %c0_i32 = arith.constant 0 : i32
    %c0_i32_0 = arith.constant 0 : i32
    %c0_i32_1 = arith.constant 0 : i32
    return %c0_i32, %c0_i32_0 : i32, i32
  }
  func.func @transform_5(%arg0: i32) -> (i32, i32) {
    %c0_i32 = arith.constant 0 : i32
    %c0_i32_0 = arith.constant 0 : i32
    return %arg0, %c0_i32 : i32, i32
  }
}

</mosaic_0001>

<llo_original>
// kernel: tpu_custom_call.1
$region0: #{tpu_custom_call.1}
  #allocation0 [shape = 'u32[]', space=smem, size = 0x4, offset = 0x4, fixed_abs, tag = 'smem constant byte address 0x4 - core index']
  #allocation1 [shape = 'u32[144,128]{1,0:T(1,128)}', space=vmem, size = 0x12000, scoped, tag = 'internal scratch']
  %s0 = inlined_call_operand.hbm [shape: bf16[16,8,128], index: 0, kind: input, shape index: {}]
  %s1 = inlined_call_operand.vmem [shape: f32[16,8,1], index: 1, kind: input, shape index: {}]
  %s2 = inlined_call_operand.vmem [shape: bf16[128,256], index: 2, kind: input, shape index: {}]
  %s3 = inlined_call_operand.hbm [shape: bf16[128,128], index: 3, kind: input, shape index: {}]
  %s4 = inlined_call_operand.hbm [shape: bf16[128,128], index: 4, kind: input, shape index: {}]
  %s5 = inlined_call_operand.hbm [shape: f32[16,128], index: 5, kind: output, shape index: {}]
  %s6 = sld [smem:[#allocation0]]
  $region65: #{tpu_custom_call.1} parent=0
    _
  %s8 = ssub.s32 1, %s6
  %s9 = scalar_select 0, %s8, %s6
  $region1: #{tpu_custom_call.1} parent=0
    #allocation2 [shape = 'u8[32768]{0}', space=vmem, size = 0x8000, scoped, tag = 'input window, operand 0']
    #allocation3 [shape = 's32[2]{0}', space=sflag, size = 0x8, scoped, tag = 'scoped memory for tpu_custom_call.1']
    #allocation4 [shape = 's32[2]{0}', space=sflag, size = 0x8, scoped, tag = 'scoped memory for tpu_custom_call.1']
    #allocation5 [shape = 'u8[32768]{0}', space=vmem, size = 0x8000, scoped, tag = 'input window, operand 3, single buffered']
    #allocation6 [shape = 's32[1]{0}', space=sflag, size = 0x4, scoped, tag = 'scoped memory for tpu_custom_call.1']
    #allocation7 [shape = 'u8[32768]{0}', space=vmem, size = 0x8000, scoped, tag = 'input window, operand 4, single buffered']
    #allocation8 [shape = 'u8[8192]{0}', space=vmem, size = 0x2000, scoped, tag = 'output window, operand 0']
    %10 = vsyncpa [#allocation3], 0
    %s11 = scalar_lea.sflag [#allocation3], 1
    %12 = vsyncpa %s11, 0
    %13 = vsyncpa [#allocation6], 0
    %14 = vsyncpa [#allocation4], 0
    %s15 = scalar_lea.sflag [#allocation4], 1
    %16 = vsyncpa %s15, 0
    loop: start=0, step=1, limit=4
    $region2: #{tpu_custom_call.1} parent=1 // loop_pre_header
      _
    $region3: #{tpu_custom_call.1} parent=1 // loop_header
      %s18 = sphi 0, %s22
      %p19 = scmp.ge.s32.totalorder %s18, 4
      %s28 = sphi 0, %s30
      %s31 = sphi 0, %s28
      %s32 = sphi 0, %s31
      %s48 = sphi 0, %s32
      %s54 = sphi 0, %s56
      %s57 = sphi 0, %s54
      %s58 = sphi 0, %s57
      %s74 = sphi 0, %s58
      %s78 = sphi 0, %s78
      %s80 = sphi 0, %s78
      %s81 = sphi 0, %s80
      %s95 = sphi 0, %s81
      %s99 = sphi 0, %s99
      %s101 = sphi 0, %s99
      %s102 = sphi 0, %s101
      %s116 = sphi 0, %s102
      %s120 = sphi 0, %s120
      %s122 = sphi 0, %s120
      %s123 = sphi 0, %s122
      %s137 = sphi 0, %s123
      %s143 = sphi 0, %s145
      %s146 = sphi 0, %s143
      %s147 = sphi 0, %s146
      %s163 = sphi 0, %s147
    $region4: #{tpu_custom_call.1} parent=1 // loop_header_branch
      %21 = sbr.rel (%p19) target = $region8
    $region5: #{tpu_custom_call.1} parent=1 // loop_body
      %s23 = ssub.s32 %s18, 1
      %s24 = ssub.s32 %s18, 2
      %s25 = sadd.s32 %s18, 1
      %s26 = ssub.s32 %s18, %s25
      %p27 = scmp.eq.s32.totalorder %s26, 0
      %s29 = sadd.s32 %s28, 1
      %s30 = scalar_select %p27, %s28, %s29
      %p33 = pneg %p27
      %p34 = scmp.eq.s32.totalorder %s18, 1
      %p35 = por %p33, %p34
      %p36 = scmp.ne.s32.totalorder %s28, %s31
      %p37 = scmp.eq.s32.totalorder %s18, 0
      %p38 = por %p36, %p37
      %p39 = scmp.ne.s32.totalorder %s28, %s31
      %p40 = scmp.eq.s32.totalorder %s23, 1
      %p41 = por %p39, %p40
      %p42 = scmp.ne.s32.totalorder %s31, %s32
      %p43 = scmp.eq.s32.totalorder %s23, 0
      %p44 = por %p42, %p43
      %p45 = scmp.ne.s32.totalorder %s31, %s32
      %p46 = scmp.eq.s32.totalorder %s24, 1
      %p47 = por %p45, %p46
      %p49 = scmp.ne.s32.totalorder %s32, %s48
      %p50 = scmp.eq.s32.totalorder %s24, 0
      %p51 = por %p49, %p50
      %s52 = ssub.s32 %s18, %s25
      %p53 = scmp.eq.s32.totalorder %s52, 0
      %s55 = sadd.s32 %s54, 1
      %s56 = scalar_select %p53, %s54, %s55
      %p59 = pneg %p53
      %p60 = scmp.eq.s32.totalorder %s18, 1
      %p61 = por %p59, %p60
      %p62 = scmp.ne.s32.totalorder %s54, %s57
      %p63 = scmp.eq.s32.totalorder %s18, 0
      %p64 = por %p62, %p63
      %p65 = scmp.ne.s32.totalorder %s54, %s57
      %p66 = scmp.eq.s32.totalorder %s23, 1
      %p67 = por %p65, %p66
      %p68 = scmp.ne.s32.totalorder %s57, %s58
      %p69 = scmp.eq.s32.totalorder %s23, 0
      %p70 = por %p68, %p69
      %p71 = scmp.ne.s32.totalorder %s57, %s58
      %p72 = scmp.eq.s32.totalorder %s24, 1
      %p73 = por %p71, %p72
      %p75 = scmp.ne.s32.totalorder %s58, %s74
      %p76 = scmp.eq.s32.totalorder %s24, 0
      %p77 = por %p75, %p76
      %s79 = sadd.s32 %s78, 1
      %p82 = scmp.eq.s32.totalorder %s18, 1
      %p83 = scmp.ne.s32.totalorder %s78, %s80
      %p84 = scmp.eq.s32.totalorder %s18, 0
      %p85 = por %p83, %p84
      %p86 = scmp.ne.s32.totalorder %s78, %s80
      %p87 = scmp.eq.s32.totalorder %s23, 1
      %p88 = por %p86, %p87
      %p89 = scmp.ne.s32.totalorder %s80, %s81
      %p90 = scmp.eq.s32.totalorder %s23, 0
      %p91 = por %p89, %p90
      %p92 = scmp.ne.s32.totalorder %s80, %s81
      %p93 = scmp.eq.s32.totalorder %s24, 1
      %p94 = por %p92, %p93
      %p96 = scmp.ne.s32.totalorder %s81, %s95
      %p97 = scmp.eq.s32.totalorder %s24, 0
      %p98 = por %p96, %p97
      %s100 = sadd.s32 %s99, 1
      %p103 = scmp.eq.s32.totalorder %s18, 1
      %p104 = scmp.ne.s32.totalorder %s99, %s101
      %p105 = scmp.eq.s32.totalorder %s18, 0
      %p106 = por %p104, %p105
      %p107 = scmp.ne.s32.totalorder %s99, %s101
      %p108 = scmp.eq.s32.totalorder %s23, 1
      %p109 = por %p107, %p108
      %p110 = scmp.ne.s32.totalorder %s101, %s102
      %p111 = scmp.eq.s32.totalorder %s23, 0
      %p112 = por %p110, %p111
      %p113 = scmp.ne.s32.totalorder %s101, %s102
      %p114 = scmp.eq.s32.totalorder %s24, 1
      %p115 = por %p113, %p114
      %p117 = scmp.ne.s32.totalorder %s102, %s116
      %p118 = scmp.eq.s32.totalorder %s24, 0
      %p119 = por %p117, %p118
      %s121 = sadd.s32 %s120, 1
      %p124 = scmp.eq.s32.totalorder %s18, 1
      %p125 = scmp.ne.s32.totalorder %s120, %s122
      %p126 = scmp.eq.s32.totalorder %s18, 0
      %p127 = por %p125, %p126
      %p128 = scmp.ne.s32.totalorder %s120, %s122
      %p129 = scmp.eq.s32.totalorder %s23, 1
      %p130 = por %p128, %p129
      %p131 = scmp.ne.s32.totalorder %s122, %s123
      %p132 = scmp.eq.s32.totalorder %s23, 0
      %p133 = por %p131, %p132
      %p134 = scmp.ne.s32.totalorder %s122, %s123
      %p135 = scmp.eq.s32.totalorder %s24, 1
      %p136 = por %p134, %p135
      %p138 = scmp.ne.s32.totalorder %s123, %s137
      %p139 = scmp.eq.s32.totalorder %s24, 0
      %p140 = por %p138, %p139
      %s141 = ssub.s32 %s18, %s25
      %p142 = scmp.eq.s32.totalorder %s141, 0
      %s144 = sadd.s32 %s143, 1
      %s145 = scalar_select %p142, %s143, %s144
      %p148 = pneg %p142
      %p149 = scmp.eq.s32.totalorder %s18, 1
      %p150 = por %p148, %p149
      %p151 = scmp.ne.s32.totalorder %s143, %s146
      %p152 = scmp.eq.s32.totalorder %s18, 0
      %p153 = por %p151, %p152
      %p154 = scmp.ne.s32.totalorder %s143, %s146
      %p155 = scmp.eq.s32.totalorder %s23, 1
      %p156 = por %p154, %p155
      %p157 = scmp.ne.s32.totalorder %s146, %s147
      %p158 = scmp.eq.s32.totalorder %s23, 0
      %p159 = por %p157, %p158
      %p160 = scmp.ne.s32.totalorder %s146, %s147
      %p161 = scmp.eq.s32.totalorder %s24, 1
      %p162 = por %p160, %p161
      %p164 = scmp.ne.s32.totalorder %s147, %s163
      %p165 = scmp.eq.s32.totalorder %s24, 0
      %p166 = por %p164, %p165
      %p167 = scmp.le.s32.totalorder 1, %s18
      %p168 = scmp.lt.s32.totalorder %s18, 3
      %p169 = pnand %p167, %p168
      %p170 = pneg %p169
      // Predicated region
      $region9: #{tpu_custom_call.1} parent=5 // pred_check
        _
      $region10: #{tpu_custom_call.1} parent=5 // pred_check_branch
        %172 = sbr.rel (%p169) target = $region12
      $region11: #{tpu_custom_call.1} parent=5 // pred_region
        %s173 = ssub.s32 %s18, 1
        // Predicated region
        $region13: #{tpu_custom_call.1} parent=11 // pred_check
          %p174 = pneg %p91
        $region14: #{tpu_custom_call.1} parent=11 // pred_check_branch
          %176 = sbr.rel (%p174) target = $region16
        $region15: #{tpu_custom_call.1} parent=11 // pred_region
          _
        $region16: #{tpu_custom_call.1} parent=11 // pred_fallthru
          _
        // Predicated region
        $region17: #{tpu_custom_call.1} parent=11 // pred_check
          %p177 = pneg %p112
        $region18: #{tpu_custom_call.1} parent=11 // pred_check_branch
          %179 = sbr.rel (%p177) target = $region20
        $region19: #{tpu_custom_call.1} parent=11 // pred_region
          %s181 = ssub.s32 1024, 1024
          %182 = vsyncadd [#allocation6], %s181
          %s183 = sshll.u32 [#allocation5], 4
          %s184 = int_to_ptr.vmem [resolvable:$true] %s183
          %189 = dma.hbm_to_vmem [thread:$0]  %s3, 1024, %s184, [#allocation6], 64, 64, 4
        $region20: #{tpu_custom_call.1} parent=11 // pred_fallthru
          _
        // Predicated region
        $region21: #{tpu_custom_call.1} parent=11 // pred_check
          %p190 = pneg %p133
        $region22: #{tpu_custom_call.1} parent=11 // pred_check_branch
          %192 = sbr.rel (%p190) target = $region24
        $region23: #{tpu_custom_call.1} parent=11 // pred_region
          %s194 = ssub.s32 1024, 1024
          %195 = vsyncadd [#allocation6], %s194
          %s196 = sshll.u32 [#allocation7], 4
          %s197 = int_to_ptr.vmem [resolvable:$true] %s196
          %202 = dma.hbm_to_vmem [thread:$0]  %s4, 1024, %s197, [#allocation6], 64, 64, 4
        $region24: #{tpu_custom_call.1} parent=11 // pred_fallthru
          _
      $region12: #{tpu_custom_call.1} parent=5 // pred_fallthru
        _
      %p203 = scmp.lt.s32.totalorder %s18, 2
      // Predicated region
      $region25: #{tpu_custom_call.1} parent=5 // pred_check
        %p204 = pneg %p203
      $region26: #{tpu_custom_call.1} parent=5 // pred_check_branch
        %206 = sbr.rel (%p204) target = $region28
      $region27: #{tpu_custom_call.1} parent=5 // pred_region
        // Predicated region
        $region29: #{tpu_custom_call.1} parent=27 // pred_check
          %p207 = pneg %p38
        $region30: #{tpu_custom_call.1} parent=27 // pred_check_branch
          %209 = sbr.rel (%p207) target = $region32
        $region31: #{tpu_custom_call.1} parent=27 // pred_region
          %s210 = sand.u32 %s28, 1
          %s211 = scalar_lea.sflag [#allocation3], %s210
          %s212 = sand.u32 %s28, 1
          %s213 = smul.addr %s212, 32
          %s214 = scalar_lea.vmem [#allocation2], %s213
          %s215 = smul.u32 8, %s18
          %s217 = ssub.s32 512, 512
          %218 = vsyncadd %s211, %s217
          %s219 = smul.addr %s215, 64
          %s220 = scalar_lea.hbm %s0, %s219
          %s221 = sshll.u32 %s214, 4
          %s222 = int_to_ptr.vmem [resolvable:$true] %s221
          %227 = dma.hbm_to_vmem [thread:$0]  %s220, 512, %s222, %s211, 64, 64, 4
        $region32: #{tpu_custom_call.1} parent=27 // pred_fallthru
          _
        // Predicated region
        $region33: #{tpu_custom_call.1} parent=27 // pred_check
          %p228 = pneg %p64
        $region34: #{tpu_custom_call.1} parent=27 // pred_check_branch
          %230 = sbr.rel (%p228) target = $region36
        $region35: #{tpu_custom_call.1} parent=27 // pred_region
          %s231 = smul.u32 8, %s18
          %p232 = scmp.lt.s32.totalorder %s231, 15
          %s233 = scalar_select %p232, %s231, 15
          %s234 = smul.addr %s233, 8
          %s235 = scalar_lea.vmem %s1, %s234
          %s236 = smul.u32 8, %s18
        $region36: #{tpu_custom_call.1} parent=27 // pred_fallthru
          _
      $region28: #{tpu_custom_call.1} parent=5 // pred_fallthru
        _
      %p237 = scmp.le.s32.totalorder 1, %s18
      %p238 = scmp.lt.s32.totalorder %s18, 3
      %p239 = pnand %p237, %p238
      %p240 = pneg %p239
      // Predicated region
      $region37: #{tpu_custom_call.1} parent=5 // pred_check
        _
      $region38: #{tpu_custom_call.1} parent=5 // pred_check_branch
        %242 = sbr.rel (%p239) target = $region40
      $region39: #{tpu_custom_call.1} parent=5 // pred_region
        %s243 = ssub.s32 %s18, 1
        %s244 = sand.u32 %s31, 1
        %s245 = scalar_lea.sflag [#allocation3], %s244
        %s246 = sand.u32 %s31, 1
        %s247 = smul.addr %s246, 32
        %s248 = scalar_lea.vmem [#allocation2], %s247
        // Predicated region
        $region41: #{tpu_custom_call.1} parent=39 // pred_check
          %p249 = pneg %p44
        $region42: #{tpu_custom_call.1} parent=39 // pred_check_branch
          %251 = sbr.rel (%p249) target = $region44
        $region43: #{tpu_custom_call.1} parent=39 // pred_region
          %252 = dma.done %s245, 512
        $region44: #{tpu_custom_call.1} parent=39 // pred_fallthru
          _
        // Predicated region
        $region45: #{tpu_custom_call.1} parent=39 // pred_check
          %p253 = pneg %p112
        $region46: #{tpu_custom_call.1} parent=39 // pred_check_branch
          %255 = sbr.rel (%p253) target = $region48
        $region47: #{tpu_custom_call.1} parent=39 // pred_region
          %256 = dma.done [#allocation6], 1024
        $region48: #{tpu_custom_call.1} parent=39 // pred_fallthru
          _
        // Predicated region
        $region49: #{tpu_custom_call.1} parent=39 // pred_check
          %p257 = pneg %p133
        $region50: #{tpu_custom_call.1} parent=39 // pred_check_branch
          %259 = sbr.rel (%p257) target = $region52
        $region51: #{tpu_custom_call.1} parent=39 // pred_region
          %260 = dma.done [#allocation6], 1024
        $region52: #{tpu_custom_call.1} parent=39 // pred_fallthru
          _
        %s261 = sand.u32 %s31, 1
        %s262 = scalar_lea.sflag [#allocation3], %s261
        %s263 = sand.u32 %s31, 1
        %s264 = smul.addr %s263, 32
        %s265 = scalar_lea.vmem [#allocation2], %s264
        %p266 = pneg %p44
        %p267 = pneg %p41
        %s268 = smul.u32 8, %s23
        %p269 = scmp.lt.s32.totalorder %s268, 15
        %s270 = scalar_select %p269, %s268, 15
        %s271 = smul.addr %s270, 8
        %s272 = scalar_lea.vmem %s1, %s271
        %p273 = pneg %p70
        %p274 = pneg %p67
        %p275 = pneg %p91
        %p276 = pneg %p88
        %p277 = pneg %p112
        %p278 = pneg %p109
        %p279 = pneg %p133
        %p280 = pneg %p130
        %p281 = pneg %p159
        %p282 = pneg %p156
        %s283 = sand.u32 %s146, 1
        %s284 = scalar_lea.sflag [#allocation4], %s283
        %s285 = sand.u32 %s146, 1
        %s286 = smul.addr %s285, 8
        %s287 = scalar_lea.vmem [#allocation8], %s286
        %s288 = smul.u32 8, %s23
        %s289 = smul.u32 8, %s23
        %p290 = scmp.lt.s32.totalorder %s289, 15
        %s291 = scalar_select %p290, %s289, 15
        %s292 = smul.addr %s291, 8
        %s293 = scalar_lea.vmem %s1, %s292
        %s294 = smul.u32 8, %s23
        %v296 = vld [vmem:[%s248] sm:$0xf]
        %v297 = vld [vmem:[%s248 + $0x4] sm:$0xf]
        %v298 = vld [vmem:[%s248 + $0x8] sm:$0xf]
        %v299 = vld [vmem:[%s248 + $0xc] sm:$0xf]
        %v300 = vld [vmem:[%s248 + $0x10] sm:$0xf]
        %v301 = vld [vmem:[%s248 + $0x14] sm:$0xf]
        %v302 = vld [vmem:[%s248 + $0x18] sm:$0xf]
        %v303 = vld [vmem:[%s248 + $0x1c] sm:$0xf]
        %v304 = vld [vmem:[%s2] sm:$0xff]
        %v305 = vld [vmem:[%s2 + $0x8] sm:$0xff]
        %v306 = vld [vmem:[%s2 + $0x10] sm:$0xff]
        %v307 = vld [vmem:[%s2 + $0x18] sm:$0xff]
        %v308 = vld [vmem:[%s2 + $0x20] sm:$0xff]
        %v309 = vld [vmem:[%s2 + $0x28] sm:$0xff]
        %v310 = vld [vmem:[%s2 + $0x30] sm:$0xff]
        %v311 = vld [vmem:[%s2 + $0x38] sm:$0xff]
        %v312 = vld [vmem:[%s2 + $0x40] sm:$0xff]
        %v313 = vld [vmem:[%s2 + $0x48] sm:$0xff]
        %v314 = vld [vmem:[%s2 + $0x50] sm:$0xff]
        %v315 = vld [vmem:[%s2 + $0x58] sm:$0xff]
        %v316 = vld [vmem:[%s2 + $0x60] sm:$0xff]
        %v317 = vld [vmem:[%s2 + $0x68] sm:$0xff]
        %v318 = vld [vmem:[%s2 + $0x70] sm:$0xff]
        %v319 = vld [vmem:[%s2 + $0x78] sm:$0xff]
        %v328 = vunpack.c.l.b16 %v296
        %v329 = vunpack.c.l.b16 %v297
        %v330 = vunpack.c.l.b16 %v298
        %v331 = vunpack.c.l.b16 %v299
        %v332 = vunpack.c.l.b16 %v300
        %v333 = vunpack.c.l.b16 %v301
        %v334 = vunpack.c.l.b16 %v302
        %v335 = vunpack.c.l.b16 %v303
        %v336 = vpack.c.b16 %v329, %v328
        %v337 = vpack.c.b16 %v331, %v330
        %v338 = vpack.c.b16 %v333, %v332
        %v339 = vpack.c.b16 %v335, %v334
        %v360 = vunpack.c.l.b16 %v304
        %v361 = vunpack.c.h.b16 %v304
        %v362 = vunpack.c.l.b16 %v305
        %v363 = vunpack.c.h.b16 %v305
        %v364 = vunpack.c.l.b16 %v306
        %v365 = vunpack.c.h.b16 %v306
        %v366 = vunpack.c.l.b16 %v307
        %v367 = vunpack.c.h.b16 %v307
        %v368 = vunpack.c.l.b16 %v308
        %v369 = vunpack.c.h.b16 %v308
        %v370 = vunpack.c.l.b16 %v309
        %v371 = vunpack.c.h.b16 %v309
        %v372 = vunpack.c.l.b16 %v310
        %v373 = vunpack.c.h.b16 %v310
        %v374 = vunpack.c.l.b16 %v311
        %v375 = vunpack.c.h.b16 %v311
        %v376 = vunpack.c.l.b16 %v312
        %v377 = vunpack.c.h.b16 %v312
        %v378 = vunpack.c.l.b16 %v313
        %v379 = vunpack.c.h.b16 %v313
        %v380 = vunpack.c.l.b16 %v314
        %v381 = vunpack.c.h.b16 %v314
        %v382 = vunpack.c.l.b16 %v315
        %v383 = vunpack.c.h.b16 %v315
        %v384 = vunpack.c.l.b16 %v316
        %v385 = vunpack.c.h.b16 %v316
        %v386 = vunpack.c.l.b16 %v317
        %v387 = vunpack.c.h.b16 %v317
        %v388 = vunpack.c.l.b16 %v318
        %v389 = vunpack.c.h.b16 %v318
        %v390 = vunpack.c.l.b16 %v319
        %v391 = vunpack.c.h.b16 %v319
        %v392 = vpack.c.b16 %v362, %v360
        %v393 = vpack.c.b16 %v363, %v361
        %v394 = vpack.c.b16 %v366, %v364
        %v395 = vpack.c.b16 %v367, %v365
        %v396 = vpack.c.b16 %v370, %v368
        %v397 = vpack.c.b16 %v371, %v369
        %v398 = vpack.c.b16 %v374, %v372
        %v399 = vpack.c.b16 %v375, %v373
        %v400 = vpack.c.b16 %v378, %v376
        %v401 = vpack.c.b16 %v379, %v377
        %v402 = vpack.c.b16 %v382, %v380
        %v403 = vpack.c.b16 %v383, %v381
        %v404 = vpack.c.b16 %v386, %v384
        %v405 = vpack.c.b16 %v387, %v385
        %v406 = vpack.c.b16 %v390, %v388
        %v407 = vpack.c.b16 %v391, %v389
        %424 = vmatprep.subr.bf16.mxu0 %v407
        %425 = vmatpush1.bf16.msra.mxu0 %v406
        %426 = vmatprep.subr.bf16.mxu0 %v405
        %427 = vmatpush1.bf16.msra.mxu0 %v404
        %428 = vmatprep.subr.bf16.mxu0 %v403
        %429 = vmatpush1.bf16.msra.mxu0 %v402
        %430 = vmatprep.subr.bf16.mxu0 %v401
        %431 = vmatpush1.bf16.msra.mxu0 %v400
        %432 = vmatprep.subr.bf16.mxu0 %v399
        %433 = vmatpush1.bf16.msra.mxu0 %v398
        %434 = vmatprep.subr.bf16.mxu0 %v397
        %435 = vmatpush1.bf16.msra.mxu0 %v396
        %436 = vmatprep.subr.bf16.mxu0 %v395
        %437 = vmatpush1.bf16.msra.mxu0 %v394
        %438 = vmatprep.subr.bf16.mxu0 %v393
        %439 = vmatpush1.bf16.msra.mxu0 %v392
        %440 = vmatprep.subr.bf16.mxu0 0
        %441 = vmatpush2.bf16.msra.mxu0 0
        %442 = vmatprep.subr.bf16.mxu0 0
        %443 = vmatpush2.bf16.msra.mxu0 0
        %444 = vmatprep.subr.bf16.mxu0 0
        %445 = vmatpush2.bf16.msra.mxu0 0
        %446 = vmatprep.subr.bf16.mxu0 0
        %447 = vmatpush2.bf16.msra.mxu0 0
        %448 = vmatprep.subr.bf16.mxu0 0
        %449 = vmatpush2.bf16.msra.mxu0 0
        %450 = vmatprep.subr.bf16.mxu0 0
        %451 = vmatpush2.bf16.msra.mxu0 0
        %452 = vmatprep.subr.bf16.mxu0 0
        %453 = vmatpush2.bf16.msra.mxu0 0
        %454 = vmatprep.subr.bf16.mxu0 0
        %455 = vmatpush2.bf16.msra.mxu0 0
        %456 = vmatprep.mubr.bf16.mxu0 0
        %457 = vmatmul.mubr.bf16.gmra.mxu0 %v336
        %v458 = vpop.f32.mrf.mxu0
        %v459 = vadd.f32 0.0, %v458
        %v460 = vpop.f32.mrf.mxu0
        %v461 = vadd.f32 0.0, %v460
        %v462 = vpop.f32.mrf.mxu0
        %v463 = vadd.f32 0.0, %v462
        %v464 = vpop.f32.mrf.mxu0
        %v465 = vadd.f32 0.0, %v464
        %466 = vmatprep.mubr.bf16.mxu0 0
        %467 = vmatmul.mubr.bf16.gmra.mxu0 %v337
        %v468 = vpop.f32.mrf.mxu0
        %v469 = vadd.f32 0.0, %v468
        %v470 = vpop.f32.mrf.mxu0
        %v471 = vadd.f32 0.0, %v470
        %v472 = vpop.f32.mrf.mxu0
        %v473 = vadd.f32 0.0, %v472
        %v474 = vpop.f32.mrf.mxu0
        %v475 = vadd.f32 0.0, %v474
        %476 = vmatprep.mubr.bf16.mxu0 0
        %477 = vmatmul.mubr.bf16.gmra.mxu0 %v338
        %v478 = vpop.f32.mrf.mxu0
        %v479 = vadd.f32 0.0, %v478
        %v480 = vpop.f32.mrf.mxu0
        %v481 = vadd.f32 0.0, %v480
        %v482 = vpop.f32.mrf.mxu0
        %v483 = vadd.f32 0.0, %v482
        %v484 = vpop.f32.mrf.mxu0
        %v485 = vadd.f32 0.0, %v484
        %486 = vmatprep.mubr.bf16.mxu0 0
        %487 = vmatmul.mubr.bf16.gmra.mxu0 %v339
        %v488 = vpop.f32.mrf.mxu0
        %v489 = vadd.f32 0.0, %v488
        %v490 = vpop.f32.mrf.mxu0
        %v491 = vadd.f32 0.0, %v490
        %v492 = vpop.f32.mrf.mxu0
        %v493 = vadd.f32 0.0, %v492
        %v494 = vpop.f32.mrf.mxu0
        %v495 = vadd.f32 0.0, %v494
        %496 = vdwg.mxu0
        %v497 = vld [vmem:[%s293] sm:$0xff]
        %v498 = vld [vmem:[%s293 + $0x8] sm:$0xff]
        %v499 = vld [vmem:[%s293 + $0x10] sm:$0xff]
        %v500 = vld [vmem:[%s293 + $0x18] sm:$0xff]
        %v501 = vld [vmem:[%s293 + $0x20] sm:$0xff]
        %v502 = vld [vmem:[%s293 + $0x28] sm:$0xff]
        %v503 = vld [vmem:[%s293 + $0x30] sm:$0xff]
        %v504 = vld [vmem:[%s293 + $0x38] sm:$0xff]
        %506 = vset.pattern.permute.xlu0 0
        %507 = vperm.xlu0 %506, %v497
        %v508 = vpop.permute.xlu0 %507
        %511 = vset.pattern.permute.xlu0 0
        %512 = vperm.xlu0 %511, %v498
        %v513 = vpop.permute.xlu0 %512
        %516 = vset.pattern.permute.xlu0 0
        %517 = vperm.xlu0 %516, %v499
        %v518 = vpop.permute.xlu0 %517
        %521 = vset.pattern.permute.xlu0 0
        %522 = vperm.xlu0 %521, %v500
        %v523 = vpop.permute.xlu0 %522
        %526 = vset.pattern.permute.xlu0 0
        %527 = vperm.xlu0 %526, %v501
        %v528 = vpop.permute.xlu0 %527
        %531 = vset.pattern.permute.xlu0 0
        %532 = vperm.xlu0 %531, %v502
        %v533 = vpop.permute.xlu0 %532
        %536 = vset.pattern.permute.xlu0 0
        %537 = vperm.xlu0 %536, %v503
        %v538 = vpop.permute.xlu0 %537
        %541 = vset.pattern.permute.xlu0 0
        %542 = vperm.xlu0 %541, %v504
        %v543 = vpop.permute.xlu0 %542
        %v545 = vmul.f32 %v461, %v508
        %v546 = vmul.f32 %v465, %v513
        %v547 = vmul.f32 %v471, %v518
        %v548 = vmul.f32 %v475, %v523
        %v549 = vmul.f32 %v481, %v528
        %v550 = vmul.f32 %v485, %v533
        %v551 = vmul.f32 %v491, %v538
        %v552 = vmul.f32 %v495, %v543
        %v553 = vsub.f32 1.0, %v497
        %v554 = vsub.f32 1.0, %v498
        %v555 = vsub.f32 1.0, %v499
        %v556 = vsub.f32 1.0, %v500
        %v557 = vsub.f32 1.0, %v501
        %v558 = vsub.f32 1.0, %v502
        %v559 = vsub.f32 1.0, %v503
        %v560 = vsub.f32 1.0, %v504
        %v561 = vmul.f32 %v553, -1e+08
        %v562 = vmul.f32 %v554, -1e+08
        %v563 = vmul.f32 %v555, -1e+08
        %v564 = vmul.f32 %v556, -1e+08
        %v565 = vmul.f32 %v557, -1e+08
        %v566 = vmul.f32 %v558, -1e+08
        %v567 = vmul.f32 %v559, -1e+08
        %v568 = vmul.f32 %v560, -1e+08
        %570 = vset.pattern.permute.xlu0 0
        %571 = vperm.xlu0 %570, %v561
        %v572 = vpop.permute.xlu0 %571
        %575 = vset.pattern.permute.xlu0 0
        %576 = vperm.xlu0 %575, %v562
        %v577 = vpop.permute.xlu0 %576
        %580 = vset.pattern.permute.xlu0 0
        %581 = vperm.xlu0 %580, %v563
        %v582 = vpop.permute.xlu0 %581
        %585 = vset.pattern.permute.xlu0 0
        %586 = vperm.xlu0 %585, %v564
        %v587 = vpop.permute.xlu0 %586
        %590 = vset.pattern.permute.xlu0 0
        %591 = vperm.xlu0 %590, %v565
        %v592 = vpop.permute.xlu0 %591
        %595 = vset.pattern.permute.xlu0 0
        %596 = vperm.xlu0 %595, %v566
        %v597 = vpop.permute.xlu0 %596
        %600 = vset.pattern.permute.xlu0 0
        %601 = vperm.xlu0 %600, %v567
        %v602 = vpop.permute.xlu0 %601
        %605 = vset.pattern.permute.xlu0 0
        %606 = vperm.xlu0 %605, %v568
        %v607 = vpop.permute.xlu0 %606
        %v609 = vadd.f32 %v545, %v572
        %v610 = vadd.f32 %v546, %v577
        %v611 = vadd.f32 %v547, %v582
        %v612 = vadd.f32 %v548, %v587
        %v613 = vadd.f32 %v549, %v592
        %v614 = vadd.f32 %v550, %v597
        %v615 = vadd.f32 %v551, %v602
        %v616 = vadd.f32 %v552, %v607
        %v617 = vrot.slane %v609, 4
        %v618 = vmax.f32 %v609, %v617
        %v619 = vrot.slane %v618, 2
        %v620 = vmax.f32 %v618, %v619
        %v621 = vrot.slane %v620, 1
        %v622 = vmax.f32 %v620, %v621
        %v623 = vrot.slane %v610, 4
        %v624 = vmax.f32 %v610, %v623
        %v625 = vrot.slane %v624, 2
        %v626 = vmax.f32 %v624, %v625
        %v627 = vrot.slane %v626, 1
        %v628 = vmax.f32 %v626, %v627
        %v629 = vrot.slane %v611, 4
        %v630 = vmax.f32 %v611, %v629
        %v631 = vrot.slane %v630, 2
        %v632 = vmax.f32 %v630, %v631
        %v633 = vrot.slane %v632, 1
        %v634 = vmax.f32 %v632, %v633
        %v635 = vrot.slane %v612, 4
        %v636 = vmax.f32 %v612, %v635
        %v637 = vrot.slane %v636, 2
        %v638 = vmax.f32 %v636, %v637
        %v639 = vrot.slane %v638, 1
        %v640 = vmax.f32 %v638, %v639
        %v641 = vrot.slane %v613, 4
        %v642 = vmax.f32 %v613, %v641
        %v643 = vrot.slane %v642, 2
        %v644 = vmax.f32 %v642, %v643
        %v645 = vrot.slane %v644, 1
        %v646 = vmax.f32 %v644, %v645
        %v647 = vrot.slane %v614, 4
        %v648 = vmax.f32 %v614, %v647
        %v649 = vrot.slane %v648, 2
        %v650 = vmax.f32 %v648, %v649
        %v651 = vrot.slane %v650, 1
        %v652 = vmax.f32 %v650, %v651
        %v653 = vrot.slane %v615, 4
        %v654 = vmax.f32 %v615, %v653
        %v655 = vrot.slane %v654, 2
        %v656 = vmax.f32 %v654, %v655
        %v657 = vrot.slane %v656, 1
        %v658 = vmax.f32 %v656, %v657
        %v659 = vrot.slane %v616, 4
        %v660 = vmax.f32 %v616, %v659
        %v661 = vrot.slane %v660, 2
        %v662 = vmax.f32 %v660, %v661
        %v663 = vrot.slane %v662, 1
        %v664 = vmax.f32 %v662, %v663
        %v665 = vsub.f32 %v609, %v622
        %v666 = vsub.f32 %v610, %v628
        %v667 = vsub.f32 %v611, %v634
        %v668 = vsub.f32 %v612, %v640
        %v669 = vsub.f32 %v613, %v646
        %v670 = vsub.f32 %v614, %v652
        %v671 = vsub.f32 %v615, %v658
        %v672 = vsub.f32 %v616, %v664
        %v673 = vmul.f32 %v665, 1.442695
        %v674 = vpow.pop %v673
        %v675 = vmul.f32 %v666, 1.442695
        %v676 = vpow.pop %v675
        %v677 = vmul.f32 %v667, 1.442695
        %v678 = vpow.pop %v677
        %v679 = vmul.f32 %v668, 1.442695
        %v680 = vpow.pop %v679
        %v681 = vmul.f32 %v669, 1.442695
        %v682 = vpow.pop %v681
        %v683 = vmul.f32 %v670, 1.442695
        %v684 = vpow.pop %v683
        %v685 = vmul.f32 %v671, 1.442695
        %v686 = vpow.pop %v685
        %v687 = vmul.f32 %v672, 1.442695
        %v688 = vpow.pop %v687
        %v689 = vrot.slane %v674, 4
        %v690 = vadd.f32 %v674, %v689
        %v691 = vrot.slane %v690, 2
        %v692 = vadd.f32 %v690, %v691
        %v693 = vrot.slane %v692, 1
        %v694 = vadd.f32 %v692, %v693
        %v695 = vrot.slane %v676, 4
        %v696 = vadd.f32 %v676, %v695
        %v697 = vrot.slane %v696, 2
        %v698 = vadd.f32 %v696, %v697
        %v699 = vrot.slane %v698, 1
        %v700 = vadd.f32 %v698, %v699
        %v701 = vrot.slane %v678, 4
        %v702 = vadd.f32 %v678, %v701
        %v703 = vrot.slane %v702, 2
        %v704 = vadd.f32 %v702, %v703
        %v705 = vrot.slane %v704, 1
        %v706 = vadd.f32 %v704, %v705
        %v707 = vrot.slane %v680, 4
        %v708 = vadd.f32 %v680, %v707
        %v709 = vrot.slane %v708, 2
        %v710 = vadd.f32 %v708, %v709
        %v711 = vrot.slane %v710, 1
        %v712 = vadd.f32 %v710, %v711
        %v713 = vrot.slane %v682, 4
        %v714 = vadd.f32 %v682, %v713
        %v715 = vrot.slane %v714, 2
        %v716 = vadd.f32 %v714, %v715
        %v717 = vrot.slane %v716, 1
        %v718 = vadd.f32 %v716, %v717
        %v719 = vrot.slane %v684, 4
        %v720 = vadd.f32 %v684, %v719
        %v721 = vrot.slane %v720, 2
        %v722 = vadd.f32 %v720, %v721
        %v723 = vrot.slane %v722, 1
        %v724 = vadd.f32 %v722, %v723
        %v725 = vrot.slane %v686, 4
        %v726 = vadd.f32 %v686, %v725
        %v727 = vrot.slane %v726, 2
        %v728 = vadd.f32 %v726, %v727
        %v729 = vrot.slane %v728, 1
        %v730 = vadd.f32 %v728, %v729
        %v731 = vrot.slane %v688, 4
        %v732 = vadd.f32 %v688, %v731
        %v733 = vrot.slane %v732, 2
        %v734 = vadd.f32 %v732, %v733
        %v735 = vrot.slane %v734, 1
        %v736 = vadd.f32 %v734, %v735
        %v737 = vrcp.pop %v694
        %v738 = vrcp.pop %v700
        %v739 = vrcp.pop %v706
        %v740 = vrcp.pop %v712
        %v741 = vrcp.pop %v718
        %v742 = vrcp.pop %v724
        %v743 = vrcp.pop %v730
        %v744 = vrcp.pop %v736
        %v745 = vmul.f32 %v674, %v737
        %v746 = vmul.f32 %v676, %v738
        %v747 = vmul.f32 %v678, %v739
        %v748 = vmul.f32 %v680, %v740
        %v749 = vmul.f32 %v682, %v741
        %v750 = vmul.f32 %v684, %v742
        %v751 = vmul.f32 %v686, %v743
        %v752 = vmul.f32 %v688, %v744
        %v753 = vpack.c.bf16 %v746, %v745
        %v754 = vpack.c.bf16 %v748, %v747
        %v755 = vpack.c.bf16 %v750, %v749
        %v756 = vpack.c.bf16 %v752, %v751
        %v757 = vld [vmem:[#allocation5] sm:$0xf]
        %v758 = vld [vmem:[#allocation5 + $0x4] sm:$0xf]
        %v759 = vld [vmem:[#allocation5 + $0x8] sm:$0xf]
        %v760 = vld [vmem:[#allocation5 + $0xc] sm:$0xf]
        %v761 = vld [vmem:[#allocation5 + $0x10] sm:$0xf]
        %v762 = vld [vmem:[#allocation5 + $0x14] sm:$0xf]
        %v763 = vld [vmem:[#allocation5 + $0x18] sm:$0xf]
        %v764 = vld [vmem:[#allocation5 + $0x1c] sm:$0xf]
        %v765 = vld [vmem:[#allocation5 + $0x20] sm:$0xf]
        %v766 = vld [vmem:[#allocation5 + $0x24] sm:$0xf]
        %v767 = vld [vmem:[#allocation5 + $0x28] sm:$0xf]
        %v768 = vld [vmem:[#allocation5 + $0x2c] sm:$0xf]
        %v769 = vld [vmem:[#allocation5 + $0x30] sm:$0xf]
        %v770 = vld [vmem:[#allocation5 + $0x34] sm:$0xf]
        %v771 = vld [vmem:[#allocation5 + $0x38] sm:$0xf]
        %v772 = vld [vmem:[#allocation5 + $0x3c] sm:$0xf]
        %v789 = vunpack.c.l.b16 %v757
        %v790 = vunpack.c.l.b16 %v758
        %v791 = vunpack.c.l.b16 %v759
        %v792 = vunpack.c.l.b16 %v760
        %v793 = vunpack.c.l.b16 %v761
        %v794 = vunpack.c.l.b16 %v762
        %v795 = vunpack.c.l.b16 %v763
        %v796 = vunpack.c.l.b16 %v764
        %v797 = vunpack.c.l.b16 %v765
        %v798 = vunpack.c.l.b16 %v766
        %v799 = vunpack.c.l.b16 %v767
        %v800 = vunpack.c.l.b16 %v768
        %v801 = vunpack.c.l.b16 %v769
        %v802 = vunpack.c.l.b16 %v770
        %v803 = vunpack.c.l.b16 %v771
        %v804 = vunpack.c.l.b16 %v772
        %v805 = vpack.c.b16 %v790, %v789
        %v806 = vpack.c.b16 %v792, %v791
        %v807 = vpack.c.b16 %v794, %v793
        %v808 = vpack.c.b16 %v796, %v795
        %v809 = vpack.c.b16 %v798, %v797
        %v810 = vpack.c.b16 %v800, %v799
        %v811 = vpack.c.b16 %v802, %v801
        %v812 = vpack.c.b16 %v804, %v803
        %821 = vmatprep.subr.bf16.mxu0 0
        %822 = vmatpush1.bf16.msra.mxu0 %v812
        %823 = vmatprep.subr.bf16.mxu0 0
        %824 = vmatpush1.bf16.msra.mxu0 %v811
        %825 = vmatprep.subr.bf16.mxu0 0
        %826 = vmatpush1.bf16.msra.mxu0 %v810
        %827 = vmatprep.subr.bf16.mxu0 0
        %828 = vmatpush1.bf16.msra.mxu0 %v809
        %829 = vmatprep.subr.bf16.mxu0 0
        %830 = vmatpush1.bf16.msra.mxu0 %v808
        %831 = vmatprep.subr.bf16.mxu0 0
        %832 = vmatpush1.bf16.msra.mxu0 %v807
        %833 = vmatprep.subr.bf16.mxu0 0
        %834 = vmatpush1.bf16.msra.mxu0 %v806
        %835 = vmatprep.subr.bf16.mxu0 0
        %836 = vmatpush1.bf16.msra.mxu0 %v805
        %837 = vmatprep.subr.bf16.mxu0 0
        %838 = vmatpush2.bf16.msra.mxu0 0
        %839 = vmatprep.subr.bf16.mxu0 0
        %840 = vmatpush2.bf16.msra.mxu0 0
        %841 = vmatprep.subr.bf16.mxu0 0
        %842 = vmatpush2.bf16.msra.mxu0 0
        %843 = vmatprep.subr.bf16.mxu0 0
        %844 = vmatpush2.bf16.msra.mxu0 0
        %845 = vmatprep.subr.bf16.mxu0 0
        %846 = vmatpush2.bf16.msra.mxu0 0
        %847 = vmatprep.subr.bf16.mxu0 0
        %848 = vmatpush2.bf16.msra.mxu0 0
        %849 = vmatprep.subr.bf16.mxu0 0
        %850 = vmatpush2.bf16.msra.mxu0 0
        %851 = vmatprep.subr.bf16.mxu0 0
        %852 = vmatpush2.bf16.msra.mxu0 0
        %853 = vmatprep.mubr.bf16.mxu0 0
        %854 = vmatmul.mubr.bf16.gmra.mxu0 %v753
        %v855 = vpop.f32.mrf.mxu0
        %v856 = vadd.f32 0.0, %v855
        %v857 = vpop.f32.mrf.mxu0
        %v858 = vpop.f32.mrf.mxu0
        %v859 = vadd.f32 0.0, %v858
        %v860 = vpop.f32.mrf.mxu0
        %861 = vmatprep.mubr.bf16.mxu0 0
        %862 = vmatmul.mubr.bf16.gmra.mxu0 %v754
        %v863 = vpop.f32.mrf.mxu0
        %v864 = vadd.f32 0.0, %v863
        %v865 = vpop.f32.mrf.mxu0
        %v866 = vpop.f32.mrf.mxu0
        %v867 = vadd.f32 0.0, %v866
        %v868 = vpop.f32.mrf.mxu0
        %869 = vmatprep.mubr.bf16.mxu0 0
        %870 = vmatmul.mubr.bf16.gmra.mxu0 %v755
        %v871 = vpop.f32.mrf.mxu0
        %v872 = vadd.f32 0.0, %v871
        %v873 = vpop.f32.mrf.mxu0
        %v874 = vpop.f32.mrf.mxu0
        %v875 = vadd.f32 0.0, %v874
        %v876 = vpop.f32.mrf.mxu0
        %877 = vmatprep.mubr.bf16.mxu0 0
        %878 = vmatmul.mubr.bf16.gmra.mxu0 %v756
        %v879 = vpop.f32.mrf.mxu0
        %v880 = vadd.f32 0.0, %v879
        %v881 = vpop.f32.mrf.mxu0
        %v882 = vpop.f32.mrf.mxu0
        %v883 = vadd.f32 0.0, %v882
        %v884 = vpop.f32.mrf.mxu0
        %885 = vdwg.mxu0
        %v886 = vmul.f32 %v856, %v459
        %v887 = vmul.f32 %v859, %v463
        %v888 = vmul.f32 %v864, %v469
        %v889 = vmul.f32 %v867, %v473
        %v890 = vmul.f32 %v872, %v479
        %v891 = vmul.f32 %v875, %v483
        %v892 = vmul.f32 %v880, %v489
        %v893 = vmul.f32 %v883, %v493
        %v894 = vrot.slane %v886, 4
        %v895 = vadd.f32 %v886, %v894
        %v896 = vrot.slane %v895, 2
        %v897 = vadd.f32 %v895, %v896
        %v898 = vrot.slane %v897, 1
        %v899 = vadd.f32 %v897, %v898
        %v900 = vrot.slane %v887, 4
        %v901 = vadd.f32 %v887, %v900
        %v902 = vrot.slane %v901, 2
        %v903 = vadd.f32 %v901, %v902
        %v904 = vrot.slane %v903, 1
        %v905 = vadd.f32 %v903, %v904
        %v906 = vrot.slane %v888, 4
        %v907 = vadd.f32 %v888, %v906
        %v908 = vrot.slane %v907, 2
        %v909 = vadd.f32 %v907, %v908
        %v910 = vrot.slane %v909, 1
        %v911 = vadd.f32 %v909, %v910
        %v912 = vrot.slane %v889, 4
        %v913 = vadd.f32 %v889, %v912
        %v914 = vrot.slane %v913, 2
        %v915 = vadd.f32 %v913, %v914
        %v916 = vrot.slane %v915, 1
        %v917 = vadd.f32 %v915, %v916
        %v918 = vrot.slane %v890, 4
        %v919 = vadd.f32 %v890, %v918
        %v920 = vrot.slane %v919, 2
        %v921 = vadd.f32 %v919, %v920
        %v922 = vrot.slane %v921, 1
        %v923 = vadd.f32 %v921, %v922
        %v924 = vrot.slane %v891, 4
        %v925 = vadd.f32 %v891, %v924
        %v926 = vrot.slane %v925, 2
        %v927 = vadd.f32 %v925, %v926
        %v928 = vrot.slane %v927, 1
        %v929 = vadd.f32 %v927, %v928
        %v930 = vrot.slane %v892, 4
        %v931 = vadd.f32 %v892, %v930
        %v932 = vrot.slane %v931, 2
        %v933 = vadd.f32 %v931, %v932
        %v934 = vrot.slane %v933, 1
        %v935 = vadd.f32 %v933, %v934
        %v936 = vrot.slane %v893, 4
        %v937 = vadd.f32 %v893, %v936
        %v938 = vrot.slane %v937, 2
        %v939 = vadd.f32 %v937, %v938
        %v940 = vrot.slane %v939, 1
        %v941 = vadd.f32 %v939, %v940
        %v942 = vpack.c.bf16 %v899, %v899
        %v943 = vpack.c.bf16 %v905, %v905
        %v944 = vpack.c.bf16 %v911, %v911
        %v945 = vpack.c.bf16 %v917, %v917
        %v946 = vpack.c.bf16 %v923, %v923
        %v947 = vpack.c.bf16 %v929, %v929
        %v948 = vpack.c.bf16 %v935, %v935
        %v949 = vpack.c.bf16 %v941, %v941
        %v950 = vld [vmem:[#allocation7] sm:$0xf]
        %v951 = vld [vmem:[#allocation7 + $0x4] sm:$0xf]
        %v952 = vld [vmem:[#allocation7 + $0x8] sm:$0xf]
        %v953 = vld [vmem:[#allocation7 + $0xc] sm:$0xf]
        %v954 = vld [vmem:[#allocation7 + $0x10] sm:$0xf]
        %v955 = vld [vmem:[#allocation7 + $0x14] sm:$0xf]
        %v956 = vld [vmem:[#allocation7 + $0x18] sm:$0xf]
        %v957 = vld [vmem:[#allocation7 + $0x1c] sm:$0xf]
        %v958 = vld [vmem:[#allocation7 + $0x20] sm:$0xf]
        %v959 = vld [vmem:[#allocation7 + $0x24] sm:$0xf]
        %v960 = vld [vmem:[#allocation7 + $0x28] sm:$0xf]
        %v961 = vld [vmem:[#allocation7 + $0x2c] sm:$0xf]
        %v962 = vld [vmem:[#allocation7 + $0x30] sm:$0xf]
        %v963 = vld [vmem:[#allocation7 + $0x34] sm:$0xf]
        %v964 = vld [vmem:[#allocation7 + $0x38] sm:$0xf]
        %v965 = vld [vmem:[#allocation7 + $0x3c] sm:$0xf]
        %v974 = vunpack.c.l.b16 %v942
        %v975 = vunpack.c.l.b16 %v943
        %v976 = vunpack.c.l.b16 %v944
        %v977 = vunpack.c.l.b16 %v945
        %v978 = vunpack.c.l.b16 %v946
        %v979 = vunpack.c.l.b16 %v947
        %v980 = vunpack.c.l.b16 %v948
        %v981 = vunpack.c.l.b16 %v949
        %vm982 = vcmask 1041409
        %v983 = vsel %vm982, %v975, %v974
        %vm984 = vcmask 1042434
        %v985 = vsel %vm984, %v976, %v983
        %vm986 = vcmask 1043459
        %v987 = vsel %vm986, %v977, %v985
        %vm988 = vcmask 1044484
        %v989 = vsel %vm988, %v978, %v987
        %vm990 = vcmask 1045509
        %v991 = vsel %vm990, %v979, %v989
        %vm992 = vcmask 1046534
        %v993 = vsel %vm992, %v980, %v991
        %vm994 = vcmask 1047559
        %v995 = vsel %vm994, %v981, %v993
        %v996 = vpack.c.b16 %v995, %v995
        %v1014 = vunpack.c.l.b16 %v950
        %v1015 = vunpack.c.l.b16 %v951
        %v1016 = vunpack.c.l.b16 %v952
        %v1017 = vunpack.c.l.b16 %v953
        %v1018 = vunpack.c.l.b16 %v954
        %v1019 = vunpack.c.l.b16 %v955
        %v1020 = vunpack.c.l.b16 %v956
        %v1021 = vunpack.c.l.b16 %v957
        %v1022 = vunpack.c.l.b16 %v958
        %v1023 = vunpack.c.l.b16 %v959
        %v1024 = vunpack.c.l.b16 %v960
        %v1025 = vunpack.c.l.b16 %v961
        %v1026 = vunpack.c.l.b16 %v962
        %v1027 = vunpack.c.l.b16 %v963
        %v1028 = vunpack.c.l.b16 %v964
        %v1029 = vunpack.c.l.b16 %v965
        %v1030 = vpack.c.b16 %v1015, %v1014
        %v1031 = vpack.c.b16 %v1017, %v1016
        %v1032 = vpack.c.b16 %v1019, %v1018
        %v1033 = vpack.c.b16 %v1021, %v1020
        %v1034 = vpack.c.b16 %v1023, %v1022
        %v1035 = vpack.c.b16 %v1025, %v1024
        %v1036 = vpack.c.b16 %v1027, %v1026
        %v1037 = vpack.c.b16 %v1029, %v1028
        %1046 = vmatprep.subr.bf16.mxu0 0
        %1047 = vmatpush1.bf16.msra.mxu0 %v1037
        %1048 = vmatprep.subr.bf16.mxu0 0
        %1049 = vmatpush1.bf16.msra.mxu0 %v1036
        %1050 = vmatprep.subr.bf16.mxu0 0
        %1051 = vmatpush1.bf16.msra.mxu0 %v1035
        %1052 = vmatprep.subr.bf16.mxu0 0
        %1053 = vmatpush1.bf16.msra.mxu0 %v1034
        %1054 = vmatprep.subr.bf16.mxu0 0
        %1055 = vmatpush1.bf16.msra.mxu0 %v1033
        %1056 = vmatprep.subr.bf16.mxu0 0
        %1057 = vmatpush1.bf16.msra.mxu0 %v1032
        %1058 = vmatprep.subr.bf16.mxu0 0
        %1059 = vmatpush1.bf16.msra.mxu0 %v1031
        %1060 = vmatprep.subr.bf16.mxu0 0
        %1061 = vmatpush1.bf16.msra.mxu0 %v1030
        %1062 = vmatprep.subr.bf16.mxu0 0
        %1063 = vmatpush2.bf16.msra.mxu0 0
        %1064 = vmatprep.subr.bf16.mxu0 0
        %1065 = vmatpush2.bf16.msra.mxu0 0
        %1066 = vmatprep.subr.bf16.mxu0 0
        %1067 = vmatpush2.bf16.msra.mxu0 0
        %1068 = vmatprep.subr.bf16.mxu0 0
        %1069 = vmatpush2.bf16.msra.mxu0 0
        %1070 = vmatprep.subr.bf16.mxu0 0
        %1071 = vmatpush2.bf16.msra.mxu0 0
        %1072 = vmatprep.subr.bf16.mxu0 0
        %1073 = vmatpush2.bf16.msra.mxu0 0
        %1074 = vmatprep.subr.bf16.mxu0 0
        %1075 = vmatpush2.bf16.msra.mxu0 0
        %1076 = vmatprep.subr.bf16.mxu0 0
        %1077 = vmatpush2.bf16.msra.mxu0 0
        %1078 = vmatprep.mubr.bf16.mxu0 0
        %1079 = vmatmul.mubr.bf16.gmra.mxu0 %v996
        %v1080 = vpop.f32.mrf.mxu0
        %v1081 = vadd.f32 0.0, %v1080
        %v1082 = vpop.f32.mrf.mxu0
        %v1083 = vpop.f32.mrf.mxu0
        %v1084 = vpop.f32.mrf.mxu0
        %1085 = vdwg.mxu0
        %1086 = vst [vmem:[%s287] sm:$0xff] %v1081
        %s1087 = sand.u32 %s146, 1
        %s1088 = scalar_lea.sflag [#allocation4], %s1087
        %s1089 = sand.u32 %s146, 1
        %s1090 = smul.addr %s1089, 8
        %s1091 = scalar_lea.vmem [#allocation8], %s1090
        // Predicated region
        $region53: #{tpu_custom_call.1} parent=39 // pred_check
          %p1092 = pneg %p156
        $region54: #{tpu_custom_call.1} parent=39 // pred_check_branch
          %1094 = sbr.rel (%p1092) target = $region56
        $region55: #{tpu_custom_call.1} parent=39 // pred_region
          %s1096 = ssub.s32 128, 128
          %1097 = vsyncadd %s1088, %s1096
          %s1098 = smul.addr %s23, 128
          %s1099 = scalar_lea.hbm %s5, %s1098
          %s1101 = sshll.u32 %s1091, 4
          %s1102 = int_to_ptr.vmem [resolvable:$true] %s1101
          %1104 = dma.vmem_to_hbm [thread:$0]  %s1102, 128, %s1099, %s1088
        $region56: #{tpu_custom_call.1} parent=39 // pred_fallthru
          _
      $region40: #{tpu_custom_call.1} parent=5 // pred_fallthru
        _
      %p1105 = scmp.le.s32.totalorder 2, %s18
      // Predicated region
      $region57: #{tpu_custom_call.1} parent=5 // pred_check
        %p1106 = pneg %p1105
      $region58: #{tpu_custom_call.1} parent=5 // pred_check_branch
        %1108 = sbr.rel (%p1106) target = $region60
      $region59: #{tpu_custom_call.1} parent=5 // pred_region
        %s1109 = ssub.s32 %s18, 2
        // Predicated region
        $region61: #{tpu_custom_call.1} parent=59 // pred_check
          %p1110 = pneg %p162
        $region62: #{tpu_custom_call.1} parent=59 // pred_check_branch
          %1112 = sbr.rel (%p1110) target = $region64
        $region63: #{tpu_custom_call.1} parent=59 // pred_region
          %s1113 = sand.u32 %s147, 1
          %s1114 = scalar_lea.sflag [#allocation4], %s1113
          %s1115 = sand.u32 %s147, 1
          %s1116 = smul.addr %s1115, 8
          %s1117 = scalar_lea.vmem [#allocation8], %s1116
          %1118 = dma.done %s1114, 128
        $region64: #{tpu_custom_call.1} parent=59 // pred_fallthru
          _
      $region60: #{tpu_custom_call.1} parent=5 // pred_fallthru
        _
    $region6: #{tpu_custom_call.1} parent=1 // loop_footer
      %s22 = sadd.s32 1, %s18
    $region7: #{tpu_custom_call.1} parent=1 // loop_footer_branch
      %17 = sbr.rel target = $region3
    $region8: #{tpu_custom_call.1} parent=1 // loop_exit
      _
    %1119 = vsyncpa [#allocation3], 1
    %s1120 = scalar_lea.sflag [#allocation3], 1
    %1121 = vsyncpa %s1120, 1
    %1122 = vsyncpa [#allocation6], 1
    %1123 = vsyncpa [#allocation4], 1
    %s1124 = scalar_lea.sflag [#allocation4], 1
    %1125 = vsyncpa %s1124, 1

// kernel: tpu_custom_call.1
$region0: #{tpu_custom_call.1}
  #allocation0 [shape = 'u32[]', space=smem, size = 0x4, offset = 0x4, fixed_abs, tag = 'smem constant byte address 0x4 - core index']
  #allocation1 [shape = 'u32[144,128]{1,0:T(1,128)}', space=vmem, size = 0x12000, scoped, tag = 'internal scratch']
  %s0 = inlined_call_operand.hbm [shape: bf16[16,8,128], index: 0, kind: input, shape index: {}]
  %s1 = inlined_call_operand.vmem [shape: f32[16,8,1], index: 1, kind: input, shape index: {}]
  %s2 = inlined_call_operand.vmem [shape: bf16[128,256], index: 2, kind: input, shape index: {}]
  %s3 = inlined_call_operand.hbm [shape: bf16[128,128], index: 3, kind: input, shape index: {}]
  %s4 = inlined_call_operand.hbm [shape: bf16[128,128], index: 4, kind: input, shape index: {}]
  %s5 = inlined_call_operand.hbm [shape: f32[16,128], index: 5, kind: output, shape index: {}]
  %s6 = sld [smem:[#allocation0]]
  $region65: #{tpu_custom_call.1} parent=0
    _
  %s8 = ssub.s32 1, %s6
  %s9 = scalar_select 0, %s8, %s6
  $region1: #{tpu_custom_call.1} parent=0
    #allocation2 [shape = 'u8[32768]{0}', space=vmem, size = 0x8000, scoped, tag = 'input window, operand 0']
    #allocation3 [shape = 's32[2]{0}', space=sflag, size = 0x8, scoped, tag = 'scoped memory for tpu_custom_call.1']
    #allocation4 [shape = 's32[2]{0}', space=sflag, size = 0x8, scoped, tag = 'scoped memory for tpu_custom_call.1']
    #allocation5 [shape = 'u8[32768]{0}', space=vmem, size = 0x8000, scoped, tag = 'input window, operand 3, single buffered']
    #allocation6 [shape = 's32[1]{0}', space=sflag, size = 0x4, scoped, tag = 'scoped memory for tpu_custom_call.1']
    #allocation7 [shape = 'u8[32768]{0}', space=vmem, size = 0x8000, scoped, tag = 'input window, operand 4, single buffered']
    #allocation8 [shape = 'u8[8192]{0}', space=vmem, size = 0x2000, scoped, tag = 'output window, operand 0']
    %10 = vsyncpa [#allocation3], 0
    %s11 = scalar_lea.sflag [#allocation3], 1
    %12 = vsyncpa %s11, 0
    %13 = vsyncpa [#allocation6], 0
    %14 = vsyncpa [#allocation4], 0
    %s15 = scalar_lea.sflag [#allocation4], 1
    %16 = vsyncpa %s15, 0
    loop: start=0, step=1, limit=4
    $region2: #{tpu_custom_call.1} parent=1 // loop_pre_header
      _
    $region3: #{tpu_custom_call.1} parent=1 // loop_header
      %s18 = sphi 0, %s22
      %p19 = scmp.ge.s32.totalorder %s18, 4
      %s28 = sphi 0, %s30
      %s31 = sphi 0, %s28
      %s32 = sphi 0, %s31
      %s48 = sphi 0, %s32
      %s54 = sphi 0, %s56
      %s57 = sphi 0, %s54
      %s58 = sphi 0, %s57
      %s74 = sphi 0, %s58
      %s78 = sphi 0, %s78
      %s80 = sphi 0, %s78
      %s81 = sphi 0, %s80
      %s95 = sphi 0, %s81
      %s99 = sphi 0, %s99
      %s101 = sphi 0, %s99
      %s102 = sphi 0, %s101
      %s116 = sphi 0, %s102
      %s120 = sphi 0, %s120
      %s122 = sphi 0, %s120
      %s123 = sphi 0, %s122
      %s137 = sphi 0, %s123
      %s143 = sphi 0, %s145
      %s146 = sphi 0, %s143
      %s147 = sphi 0, %s146
      %s163 = sphi 0, %s147
    $region4: #{tpu_custom_call.1} parent=1 // loop_header_branch
      %21 = sbr.rel (%p19) target = $region8
    $region5: #{tpu_custom_call.1} parent=1 // loop_body
      %s23 = ssub.s32 %s18, 1
      %s24 = ssub.s32 %s18, 2
      %s25 = sadd.s32 %s18, 1
      %s26 = ssub.s32 %s18, %s25
      %p27 = scmp.eq.s32.totalorder %s26, 0
      %s29 = sadd.s32 %s28, 1
      %s30 = scalar_select %p27, %s28, %s29
      %p33 = pneg %p27
      %p34 = scmp.eq.s32.totalorder %s18, 1
      %p35 = por %p33, %p34
      %p36 = scmp.ne.s32.totalorder %s28, %s31
      %p37 = scmp.eq.s32.totalorder %s18, 0
      %p38 = por %p36, %p37
      %p39 = scmp.ne.s32.totalorder %s28, %s31
      %p40 = scmp.eq.s32.totalorder %s23, 1
      %p41 = por %p39, %p40
      %p42 = scmp.ne.s32.totalorder %s31, %s32
      %p43 = scmp.eq.s32.totalorder %s23, 0
      %p44 = por %p42, %p43
      %p45 = scmp.ne.s32.totalorder %s31, %s32
      %p46 = scmp.eq.s32.totalorder %s24, 1
      %p47 = por %p45, %p46
      %p49 = scmp.ne.s32.totalorder %s32, %s48
      %p50 = scmp.eq.s32.totalorder %s24, 0
      %p51 = por %p49, %p50
      %s52 = ssub.s32 %s18, %s25
      %p53 = scmp.eq.s32.totalorder %s52, 0
      %s55 = sadd.s32 %s54, 1
      %s56 = scalar_select %p53, %s54, %s55
      %p59 = pneg %p53
      %p60 = scmp.eq.s32.totalorder %s18, 1
      %p61 = por %p59, %p60
      %p62 = scmp.ne.s32.totalorder %s54, %s57
      %p63 = scmp.eq.s32.totalorder %s18, 0
      %p64 = por %p62, %p63
      %p65 = scmp.ne.s32.totalorder %s54, %s57
      %p66 = scmp.eq.s32.totalorder %s23, 1
      %p67 = por %p65, %p66
      %p68 = scmp.ne.s32.totalorder %s57, %s58
      %p69 = scmp.eq.s32.totalorder %s23, 0
      %p70 = por %p68, %p69
      %p71 = scmp.ne.s32.totalorder %s57, %s58
      %p72 = scmp.eq.s32.totalorder %s24, 1
      %p73 = por %p71, %p72
      %p75 = scmp.ne.s32.totalorder %s58, %s74
      %p76 = scmp.eq.s32.totalorder %s24, 0
      %p77 = por %p75, %p76
      %s79 = sadd.s32 %s78, 1
      %p82 = scmp.eq.s32.totalorder %s18, 1
      %p83 = scmp.ne.s32.totalorder %s78, %s80
      %p84 = scmp.eq.s32.totalorder %s18, 0
      %p85 = por %p83, %p84
      %p86 = scmp.ne.s32.totalorder %s78, %s80
      %p87 = scmp.eq.s32.totalorder %s23, 1
      %p88 = por %p86, %p87
      %p89 = scmp.ne.s32.totalorder %s80, %s81
      %p90 = scmp.eq.s32.totalorder %s23, 0
      %p91 = por %p89, %p90
      %p92 = scmp.ne.s32.totalorder %s80, %s81
      %p93 = scmp.eq.s32.totalorder %s24, 1
      %p94 = por %p92, %p93
      %p96 = scmp.ne.s32.totalorder %s81, %s95
      %p97 = scmp.eq.s32.totalorder %s24, 0
      %p98 = por %p96, %p97
      %s100 = sadd.s32 %s99, 1
      %p103 = scmp.eq.s32.totalorder %s18, 1
      %p104 = scmp.ne.s32.totalorder %s99, %s101
      %p105 = scmp.eq.s32.totalorder %s18, 0
      %p106 = por %p104, %p105
      %p107 = scmp.ne.s32.totalorder %s99, %s101
      %p108 = scmp.eq.s32.totalorder %s23, 1
      %p109 = por %p107, %p108
      %p110 = scmp.ne.s32.totalorder %s101, %s102
      %p111 = scmp.eq.s32.totalorder %s23, 0
      %p112 = por %p110, %p111
      %p113 = scmp.ne.s32.totalorder %s101, %s102
      %p114 = scmp.eq.s32.totalorder %s24, 1
      %p115 = por %p113, %p114
      %p117 = scmp.ne.s32.totalorder %s102, %s116
      %p118 = scmp.eq.s32.totalorder %s24, 0
      %p119 = por %p117, %p118
      %s121 = sadd.s32 %s120, 1
      %p124 = scmp.eq.s32.totalorder %s18, 1
      %p125 = scmp.ne.s32.totalorder %s120, %s122
      %p126 = scmp.eq.s32.totalorder %s18, 0
      %p127 = por %p125, %p126
      %p128 = scmp.ne.s32.totalorder %s120, %s122
      %p129 = scmp.eq.s32.totalorder %s23, 1
      %p130 = por %p128, %p129
      %p131 = scmp.ne.s32.totalorder %s122, %s123
      %p132 = scmp.eq.s32.totalorder %s23, 0
      %p133 = por %p131, %p132
      %p134 = scmp.ne.s32.totalorder %s122, %s123
      %p135 = scmp.eq.s32.totalorder %s24, 1
      %p136 = por %p134, %p135
      %p138 = scmp.ne.s32.totalorder %s123, %s137
      %p139 = scmp.eq.s32.totalorder %s24, 0
      %p140 = por %p138, %p139
      %s141 = ssub.s32 %s18, %s25
      %p142 = scmp.eq.s32.totalorder %s141, 0
      %s144 = sadd.s32 %s143, 1
      %s145 = scalar_select %p142, %s143, %s144
      %p148 = pneg %p142
      %p149 = scmp.eq.s32.totalorder %s18, 1
      %p150 = por %p148, %p149
      %p151 = scmp.ne.s32.totalorder %s143, %s146
      %p152 = scmp.eq.s32.totalorder %s18, 0
      %p153 = por %p151, %p152
      %p154 = scmp.ne.s32.totalorder %s143, %s146
      %p155 = scmp.eq.s32.totalorder %s23, 1
      %p156 = por %p154, %p155
      %p157 = scmp.ne.s32.totalorder %s146, %s147
      %p158 = scmp.eq.s32.totalorder %s23, 0
      %p159 = por %p157, %p158
      %p160 = scmp.ne.s32.totalorder %s146, %s147
      %p161 = scmp.eq.s32.totalorder %s24, 1
      %p162 = por %p160, %p161
      %p164 = scmp.ne.s32.totalorder %s147, %s163
      %p165 = scmp.eq.s32.totalorder %s24, 0
      %p166 = por %p164, %p165
      %p167 = scmp.le.s32.totalorder 1, %s18
      %p168 = scmp.lt.s32.totalorder %s18, 3
      %p169 = pnand %p167, %p168
      %p170 = pneg %p169
      // Predicated region
      $region9: #{tpu_custom_call.1} parent=5 // pred_check
        _
      $region10: #{tpu_custom_call.1} parent=5 // pred_check_branch
        %172 = sbr.rel (%p169) target = $region12
      $region11: #{tpu_custom_call.1} parent=5 // pred_region
        %s173 = ssub.s32 %s18, 1
        // Predicated region
        $region13: #{tpu_custom_call.1} parent=11 // pred_check
          %p174 = pneg %p91
        $region14: #{tpu_custom_call.1} parent=11 // pred_check_branch
          %176 = sbr.rel (%p174) target = $region16
        $region15: #{tpu_custom_call.1} parent=11 // pred_region
          _
        $region16: #{tpu_custom_call.1} parent=11 // pred_fallthru
          _
        // Predicated region
        $region17: #{tpu_custom_call.1} parent=11 // pred_check
          %p177 = pneg %p112
        $region18: #{tpu_custom_call.1} parent=11 // pred_check_branch
          %179 = sbr.rel (%p177) target = $region20
        $region19: #{tpu_custom_call.1} parent=11 // pred_region
          %s181 = ssub.s32 1024, 1024
          %182 = vsyncadd [#allocation6], %s181
          %s183 = sshll.u32 [#allocation5], 4
          %s184 = int_to_ptr.vmem [resolvable:$true] %s183
          %189 = dma.hbm_to_vmem [thread:$0]  %s3, 1024, %s184, [#allocation6], 64, 64, 4
        $region20: #{tpu_custom_call.1} parent=11 // pred_fallthru
          _
        // Predicated region
        $region21: #{tpu_custom_call.1} parent=11 // pred_check
          %p190 = pneg %p133
        $region22: #{tpu_custom_call.1} parent=11 // pred_check_branch
          %192 = sbr.rel (%p190) target = $region24
        $region23: #{tpu_custom_call.1} parent=11 // pred_region
          %s194 = ssub.s32 1024, 1024
          %195 = vsyncadd [#allocation6], %s194
          %s196 = sshll.u32 [#allocation7], 4
          %s197 = int_to_ptr.vmem [resolvable:$true] %s196
          %202 = dma.hbm_to_vmem [thread:$0]  %s4, 1024, %s197, [#allocation6], 64, 64, 4
        $region24: #{tpu_custom_call.1} parent=11 // pred_fallthru
          _
      $region12: #{tpu_custom_call.1} parent=5 // pred_fallthru
        _
      %p203 = scmp.lt.s32.totalorder %s18, 2
      // Predicated region
      $region25: #{tpu_custom_call.1} parent=5 // pred_check
        %p204 = pneg %p203
      $region26: #{tpu_custom_call.1} parent=5 // pred_check_branch
        %206 = sbr.rel (%p204) target = $region28
      $region27: #{tpu_custom_call.1} parent=5 // pred_region
        // Predicated region
        $region29: #{tpu_custom_call.1} parent=27 // pred_check
          %p207 = pneg %p38
        $region30: #{tpu_custom_call.1} parent=27 // pred_check_branch
          %209 = sbr.rel (%p207) target = $region32
        $region31: #{tpu_custom_call.1} parent=27 // pred_region
          %s210 = sand.u32 %s28, 1
          %s211 = scalar_lea.sflag [#allocation3], %s210
          %s212 = sand.u32 %s28, 1
          %s213 = smul.addr %s212, 32
          %s214 = scalar_lea.vmem [#allocation2], %s213
          %s215 = smul.u32 8, %s18
          %s217 = ssub.s32 512, 512
          %218 = vsyncadd %s211, %s217
          %s219 = smul.addr %s215, 64
          %s220 = scalar_lea.hbm %s0, %s219
          %s221 = sshll.u32 %s214, 4
          %s222 = int_to_ptr.vmem [resolvable:$true] %s221
          %227 = dma.hbm_to_vmem [thread:$0]  %s220, 512, %s222, %s211, 64, 64, 4
        $region32: #{tpu_custom_call.1} parent=27 // pred_fallthru
          _
        // Predicated region
        $region33: #{tpu_custom_call.1} parent=27 // pred_check
          %p228 = pneg %p64
        $region34: #{tpu_custom_call.1} parent=27 // pred_check_branch
          %230 = sbr.rel (%p228) target = $region36
        $region35: #{tpu_custom_call.1} parent=27 // pred_region
          %s231 = smul.u32 8, %s18
          %p232 = scmp.lt.s32.totalorder %s231, 15
          %s233 = scalar_select %p232, %s231, 15
          %s234 = smul.addr %s233, 8
          %s235 = scalar_lea.vmem %s1, %s234
          %s236 = smul.u32 8, %s18
        $region36: #{tpu_custom_call.1} parent=27 // pred_fallthru
          _
      $region28: #{tpu_custom_call.1} parent=5 // pred_fallthru
        _
      %p237 = scmp.le.s32.totalorder 1, %s18
      %p238 = scmp.lt.s32.totalorder %s18, 3
      %p239 = pnand %p237, %p238
      %p240 = pneg %p239
      // Predicated region
      $region37: #{tpu_custom_call.1} parent=5 // pred_check
        _
      $region38: #{tpu_custom_call.1} parent=5 // pred_check_branch
        %242 = sbr.rel (%p239) target = $region40
      $region39: #{tpu_custom_call.1} parent=5 // pred_region
        %s243 = ssub.s32 %s18, 1
        %s244 = sand.u32 %s31, 1
        %s245 = scalar_lea.sflag [#allocation3], %s244
        %s246 = sand.u32 %s31, 1
        %s247 = smul.addr %s246, 32
        %s248 = scalar_lea.vmem [#allocation2], %s247
        // Predicated region
        $region41: #{tpu_custom_call.1} parent=39 // pred_check
          %p249 = pneg %p44
        $region42: #{tpu_custom_call.1} parent=39 // pred_check_branch
          %251 = sbr.rel (%p249) target = $region44
        $region43: #{tpu_custom_call.1} parent=39 // pred_region
          %252 = dma.done %s245, 512
        $region44: #{tpu_custom_call.1} parent=39 // pred_fallthru
          _
        // Predicated region
        $region45: #{tpu_custom_call.1} parent=39 // pred_check
          %p253 = pneg %p112
        $region46: #{tpu_custom_call.1} parent=39 // pred_check_branch
          %255 = sbr.rel (%p253) target = $region48
        $region47: #{tpu_custom_call.1} parent=39 // pred_region
          %256 = dma.done [#allocation6], 1024
        $region48: #{tpu_custom_call.1} parent=39 // pred_fallthru
          _
        // Predicated region
        $region49: #{tpu_custom_call.1} parent=39 // pred_check
          %p257 = pneg %p133
        $region50: #{tpu_custom_call.1} parent=39 // pred_check_branch
          %259 = sbr.rel (%p257) target = $region52
        $region51: #{tpu_custom_call.1} parent=39 // pred_region
          %260 = dma.done [#allocation6], 1024
        $region52: #{tpu_custom_call.1} parent=39 // pred_fallthru
          _
        %s261 = sand.u32 %s31, 1
        %s262 = scalar_lea.sflag [#allocation3], %s261
        %s263 = sand.u32 %s31, 1
        %s264 = smul.addr %s263, 32
        %s265 = scalar_lea.vmem [#allocation2], %s264
        %p266 = pneg %p44
        %p267 = pneg %p41
        %s268 = smul.u32 8, %s23
        %p269 = scmp.lt.s32.totalorder %s268, 15
        %s270 = scalar_select %p269, %s268, 15
        %s271 = smul.addr %s270, 8
        %s272 = scalar_lea.vmem %s1, %s271
        %p273 = pneg %p70
        %p274 = pneg %p67
        %p275 = pneg %p91
        %p276 = pneg %p88
        %p277 = pneg %p112
        %p278 = pneg %p109
        %p279 = pneg %p133
        %p280 = pneg %p130
        %p281 = pneg %p159
        %p282 = pneg %p156
        %s283 = sand.u32 %s146, 1
        %s284 = scalar_lea.sflag [#allocation4], %s283
        %s285 = sand.u32 %s146, 1
        %s286 = smul.addr %s285, 8
        %s287 = scalar_lea.vmem [#allocation8], %s286
        %s288 = smul.u32 8, %s23
        %s289 = smul.u32 8, %s23
        %p290 = scmp.lt.s32.totalorder %s289, 15
        %s291 = scalar_select %p290, %s289, 15
        %s292 = smul.addr %s291, 8
        %s293 = scalar_lea.vmem %s1, %s292
        %s294 = smul.u32 8, %s23
        %v296 = vld [vmem:[%s248] sm:$0xf]
        %v297 = vld [vmem:[%s248 + $0x4] sm:$0xf]
        %v298 = vld [vmem:[%s248 + $0x8] sm:$0xf]
        %v299 = vld [vmem:[%s248 + $0xc] sm:$0xf]
        %v300 = vld [vmem:[%s248 + $0x10] sm:$0xf]
        %v301 = vld [vmem:[%s248 + $0x14] sm:$0xf]
        %v302 = vld [vmem:[%s248 + $0x18] sm:$0xf]
        %v303 = vld [vmem:[%s248 + $0x1c] sm:$0xf]
        %v304 = vld [vmem:[%s2] sm:$0xff]
        %v305 = vld [vmem:[%s2 + $0x8] sm:$0xff]
        %v306 = vld [vmem:[%s2 + $0x10] sm:$0xff]
        %v307 = vld [vmem:[%s2 + $0x18] sm:$0xff]
        %v308 = vld [vmem:[%s2 + $0x20] sm:$0xff]
        %v309 = vld [vmem:[%s2 + $0x28] sm:$0xff]
        %v310 = vld [vmem:[%s2 + $0x30] sm:$0xff]
        %v311 = vld [vmem:[%s2 + $0x38] sm:$0xff]
        %v312 = vld [vmem:[%s2 + $0x40] sm:$0xff]
        %v313 = vld [vmem:[%s2 + $0x48] sm:$0xff]
        %v314 = vld [vmem:[%s2 + $0x50] sm:$0xff]
        %v315 = vld [vmem:[%s2 + $0x58] sm:$0xff]
        %v316 = vld [vmem:[%s2 + $0x60] sm:$0xff]
        %v317 = vld [vmem:[%s2 + $0x68] sm:$0xff]
        %v318 = vld [vmem:[%s2 + $0x70] sm:$0xff]
        %v319 = vld [vmem:[%s2 + $0x78] sm:$0xff]
        %v328 = vunpack.c.l.b16 %v296
        %v329 = vunpack.c.l.b16 %v297
        %v330 = vunpack.c.l.b16 %v298
        %v331 = vunpack.c.l.b16 %v299
        %v332 = vunpack.c.l.b16 %v300
        %v333 = vunpack.c.l.b16 %v301
        %v334 = vunpack.c.l.b16 %v302
        %v335 = vunpack.c.l.b16 %v303
        %v336 = vpack.c.b16 %v329, %v328
        %v337 = vpack.c.b16 %v331, %v330
        %v338 = vpack.c.b16 %v333, %v332
        %v339 = vpack.c.b16 %v335, %v334
        %v360 = vunpack.c.l.b16 %v304
        %v361 = vunpack.c.h.b16 %v304
        %v362 = vunpack.c.l.b16 %v305
        %v363 = vunpack.c.h.b16 %v305
        %v364 = vunpack.c.l.b16 %v306
        %v365 = vunpack.c.h.b16 %v306
        %v366 = vunpack.c.l.b16 %v307
        %v367 = vunpack.c.h.b16 %v307
        %v368 = vunpack.c.l.b16 %v308
        %v369 = vunpack.c.h.b16 %v308
        %v370 = vunpack.c.l.b16 %v309
        %v371 = vunpack.c.h.b16 %v309
        %v372 = vunpack.c.l.b16 %v310
        %v373 = vunpack.c.h.b16 %v310
        %v374 = vunpack.c.l.b16 %v311
        %v375 = vunpack.c.h.b16 %v311
        %v376 = vunpack.c.l.b16 %v312
        %v377 = vunpack.c.h.b16 %v312
        %v378 = vunpack.c.l.b16 %v313
        %v379 = vunpack.c.h.b16 %v313
        %v380 = vunpack.c.l.b16 %v314
        %v381 = vunpack.c.h.b16 %v314
        %v382 = vunpack.c.l.b16 %v315
        %v383 = vunpack.c.h.b16 %v315
        %v384 = vunpack.c.l.b16 %v316
        %v385 = vunpack.c.h.b16 %v316
        %v386 = vunpack.c.l.b16 %v317
        %v387 = vunpack.c.h.b16 %v317
        %v388 = vunpack.c.l.b16 %v318
        %v389 = vunpack.c.h.b16 %v318
        %v390 = vunpack.c.l.b16 %v319
        %v391 = vunpack.c.h.b16 %v319
        %v392 = vpack.c.b16 %v362, %v360
        %v393 = vpack.c.b16 %v363, %v361
        %v394 = vpack.c.b16 %v366, %v364
        %v395 = vpack.c.b16 %v367, %v365
        %v396 = vpack.c.b16 %v370, %v368
        %v397 = vpack.c.b16 %v371, %v369
        %v398 = vpack.c.b16 %v374, %v372
        %v399 = vpack.c.b16 %v375, %v373
        %v400 = vpack.c.b16 %v378, %v376
        %v401 = vpack.c.b16 %v379, %v377
        %v402 = vpack.c.b16 %v382, %v380
        %v403 = vpack.c.b16 %v383, %v381
        %v404 = vpack.c.b16 %v386, %v384
        %v405 = vpack.c.b16 %v387, %v385
        %v406 = vpack.c.b16 %v390, %v388
        %v407 = vpack.c.b16 %v391, %v389
        %424 = vmatprep.subr.bf16.mxu0 %v407
        %425 = vmatpush1.bf16.msra.mxu0 %v406
        %426 = vmatprep.subr.bf16.mxu0 %v405
        %427 = vmatpush1.bf16.msra.mxu0 %v404
        %428 = vmatprep.subr.bf16.mxu0 %v403
        %429 = vmatpush1.bf16.msra.mxu0 %v402
        %430 = vmatprep.subr.bf16.mxu0 %v401
        %431 = vmatpush1.bf16.msra.mxu0 %v400
        %432 = vmatprep.subr.bf16.mxu0 %v399
        %433 = vmatpush1.bf16.msra.mxu0 %v398
        %434 = vmatprep.subr.bf16.mxu0 %v397
        %435 = vmatpush1.bf16.msra.mxu0 %v396
        %436 = vmatprep.subr.bf16.mxu0 %v395
        %437 = vmatpush1.bf16.msra.mxu0 %v394
        %438 = vmatprep.subr.bf16.mxu0 %v393
        %439 = vmatpush1.bf16.msra.mxu0 %v392
        %440 = vmatprep.subr.bf16.mxu0 0
        %441 = vmatpush2.bf16.msra.mxu0 0
        %442 = vmatprep.subr.bf16.mxu0 0
        %443 = vmatpush2.bf16.msra.mxu0 0
        %444 = vmatprep.subr.bf16.mxu0 0
        %445 = vmatpush2.bf16.msra.mxu0 0
        %446 = vmatprep.subr.bf16.mxu0 0
        %447 = vmatpush2.bf16.msra.mxu0 0
        %448 = vmatprep.subr.bf16.mxu0 0
        %449 = vmatpush2.bf16.msra.mxu0 0
        %450 = vmatprep.subr.bf16.mxu0 0
        %451 = vmatpush2.bf16.msra.mxu0 0
        %452 = vmatprep.subr.bf16.mxu0 0
        %453 = vmatpush2.bf16.msra.mxu0 0
        %454 = vmatprep.subr.bf16.mxu0 0
        %455 = vmatpush2.bf16.msra.mxu0 0
        %456 = vmatprep.mubr.bf16.mxu0 0
        %457 = vmatmul.mubr.bf16.gmra.mxu0 %v336
        %v458 = vpop.f32.mrf.mxu0
        %v459 = vadd.f32 0.0, %v458
        %v460 = vpop.f32.mrf.mxu0
        %v461 = vadd.f32 0.0, %v460
        %v462 = vpop.f32.mrf.mxu0
        %v463 = vadd.f32 0.0, %v462
        %v464 = vpop.f32.mrf.mxu0
        %v465 = vadd.f32 0.0, %v464
        %466 = vmatprep.mubr.bf16.mxu0 0
        %467 = vmatmul.mubr.bf16.gmra.mxu0 %v337
        %v468 = vpop.f32.mrf.mxu0
        %v469 = vadd.f32 0.0, %v468
        %v470 = vpop.f32.mrf.mxu0
        %v471 = vadd.f32 0.0, %v470
        %v472 = vpop.f32.mrf.mxu0
        %v473 = vadd.f32 0.0, %v472
        %v474 = vpop.f32.mrf.mxu0
        %v475 = vadd.f32 0.0, %v474
        %476 = vmatprep.mubr.bf16.mxu0 0
        %477 = vmatmul.mubr.bf16.gmra.mxu0 %v338
        %v478 = vpop.f32.mrf.mxu0
        %v479 = vadd.f32 0.0, %v478
        %v480 = vpop.f32.mrf.mxu0
        %v481 = vadd.f32 0.0, %v480
        %v482 = vpop.f32.mrf.mxu0
        %v483 = vadd.f32 0.0, %v482
        %v484 = vpop.f32.mrf.mxu0
        %v485 = vadd.f32 0.0, %v484
        %486 = vmatprep.mubr.bf16.mxu0 0
        %487 = vmatmul.mubr.bf16.gmra.mxu0 %v339
        %v488 = vpop.f32.mrf.mxu0
        %v489 = vadd.f32 0.0, %v488
        %v490 = vpop.f32.mrf.mxu0
        %v491 = vadd.f32 0.0, %v490
        %v492 = vpop.f32.mrf.mxu0
        %v493 = vadd.f32 0.0, %v492
        %v494 = vpop.f32.mrf.mxu0
        %v495 = vadd.f32 0.0, %v494
        %496 = vdwg.mxu0
        %v497 = vld [vmem:[%s293] sm:$0xff]
        %v498 = vld [vmem:[%s293 + $0x8] sm:$0xff]
        %v499 = vld [vmem:[%s293 + $0x10] sm:$0xff]
        %v500 = vld [vmem:[%s293 + $0x18] sm:$0xff]
        %v501 = vld [vmem:[%s293 + $0x20] sm:$0xff]
        %v502 = vld [vmem:[%s293 + $0x28] sm:$0xff]
        %v503 = vld [vmem:[%s293 + $0x30] sm:$0xff]
        %v504 = vld [vmem:[%s293 + $0x38] sm:$0xff]
        %506 = vset.pattern.permute.xlu0 0
        %507 = vperm.xlu0 %506, %v497
        %v508 = vpop.permute.xlu0 %507
        %511 = vset.pattern.permute.xlu0 0
        %512 = vperm.xlu0 %511, %v498
        %v513 = vpop.permute.xlu0 %512
        %516 = vset.pattern.permute.xlu0 0
        %517 = vperm.xlu0 %516, %v499
        %v518 = vpop.permute.xlu0 %517
        %521 = vset.pattern.permute.xlu0 0
        %522 = vperm.xlu0 %521, %v500
        %v523 = vpop.permute.xlu0 %522
        %526 = vset.pattern.permute.xlu0 0
        %527 = vperm.xlu0 %526, %v501
        %v528 = vpop.permute.xlu0 %527
        %531 = vset.pattern.permute.xlu0 0
        %532 = vperm.xlu0 %531, %v502
        %v533 = vpop.permute.xlu0 %532
        %536 = vset.pattern.permute.xlu0 0
        %537 = vperm.xlu0 %536, %v503
        %v538 = vpop.permute.xlu0 %537
        %541 = vset.pattern.permute.xlu0 0
        %542 = vperm.xlu0 %541, %v504
        %v543 = vpop.permute.xlu0 %542
        %v545 = vmul.f32 %v461, %v508
        %v546 = vmul.f32 %v465, %v513
        %v547 = vmul.f32 %v471, %v518
        %v548 = vmul.f32 %v475, %v523
        %v549 = vmul.f32 %v481, %v528
        %v550 = vmul.f32 %v485, %v533
        %v551 = vmul.f32 %v491, %v538
        %v552 = vmul.f32 %v495, %v543
        %v553 = vsub.f32 1.0, %v497
        %v554 = vsub.f32 1.0, %v498
        %v555 = vsub.f32 1.0, %v499
        %v556 = vsub.f32 1.0, %v500
        %v557 = vsub.f32 1.0, %v501
        %v558 = vsub.f32 1.0, %v502
        %v559 = vsub.f32 1.0, %v503
        %v560 = vsub.f32 1.0, %v504
        %v561 = vmul.f32 %v553, -1e+08
        %v562 = vmul.f32 %v554, -1e+08
        %v563 = vmul.f32 %v555, -1e+08
        %v564 = vmul.f32 %v556, -1e+08
        %v565 = vmul.f32 %v557, -1e+08
        %v566 = vmul.f32 %v558, -1e+08
        %v567 = vmul.f32 %v559, -1e+08
        %v568 = vmul.f32 %v560, -1e+08
        %570 = vset.pattern.permute.xlu0 0
        %571 = vperm.xlu0 %570, %v561
        %v572 = vpop.permute.xlu0 %571
        %575 = vset.pattern.permute.xlu0 0
        %576 = vperm.xlu0 %575, %v562
        %v577 = vpop.permute.xlu0 %576
        %580 = vset.pattern.permute.xlu0 0
        %581 = vperm.xlu0 %580, %v563
        %v582 = vpop.permute.xlu0 %581
        %585 = vset.pattern.permute.xlu0 0
        %586 = vperm.xlu0 %585, %v564
        %v587 = vpop.permute.xlu0 %586
        %590 = vset.pattern.permute.xlu0 0
        %591 = vperm.xlu0 %590, %v565
        %v592 = vpop.permute.xlu0 %591
        %595 = vset.pattern.permute.xlu0 0
        %596 = vperm.xlu0 %595, %v566
        %v597 = vpop.permute.xlu0 %596
        %600 = vset.pattern.permute.xlu0 0
        %601 = vperm.xlu0 %600, %v567
        %v602 = vpop.permute.xlu0 %601
        %605 = vset.pattern.permute.xlu0 0
        %606 = vperm.xlu0 %605, %v568
        %v607 = vpop.permute.xlu0 %606
        %v609 = vadd.f32 %v545, %v572
        %v610 = vadd.f32 %v546, %v577
        %v611 = vadd.f32 %v547, %v582
        %v612 = vadd.f32 %v548, %v587
        %v613 = vadd.f32 %v549, %v592
        %v614 = vadd.f32 %v550, %v597
        %v615 = vadd.f32 %v551, %v602
        %v616 = vadd.f32 %v552, %v607
        %v617 = vrot.slane %v609, 4
        %v618 = vmax.f32 %v609, %v617
        %v619 = vrot.slane %v618, 2
        %v620 = vmax.f32 %v618, %v619
        %v621 = vrot.slane %v620, 1
        %v622 = vmax.f32 %v620, %v621
        %v623 = vrot.slane %v610, 4
        %v624 = vmax.f32 %v610, %v623
        %v625 = vrot.slane %v624, 2
        %v626 = vmax.f32 %v624, %v625
        %v627 = vrot.slane %v626, 1
        %v628 = vmax.f32 %v626, %v627
        %v629 = vrot.slane %v611, 4
        %v630 = vmax.f32 %v611, %v629
        %v631 = vrot.slane %v630, 2
        %v632 = vmax.f32 %v630, %v631
        %v633 = vrot.slane %v632, 1
        %v634 = vmax.f32 %v632, %v633
        %v635 = vrot.slane %v612, 4
        %v636 = vmax.f32 %v612, %v635
        %v637 = vrot.slane %v636, 2
        %v638 = vmax.f32 %v636, %v637
        %v639 = vrot.slane %v638, 1
        %v640 = vmax.f32 %v638, %v639
        %v641 = vrot.slane %v613, 4
        %v642 = vmax.f32 %v613, %v641
        %v643 = vrot.slane %v642, 2
        %v644 = vmax.f32 %v642, %v643
        %v645 = vrot.slane %v644, 1
        %v646 = vmax.f32 %v644, %v645
        %v647 = vrot.slane %v614, 4
        %v648 = vmax.f32 %v614, %v647
        %v649 = vrot.slane %v648, 2
        %v650 = vmax.f32 %v648, %v649
        %v651 = vrot.slane %v650, 1
        %v652 = vmax.f32 %v650, %v651
        %v653 = vrot.slane %v615, 4
        %v654 = vmax.f32 %v615, %v653
        %v655 = vrot.slane %v654, 2
        %v656 = vmax.f32 %v654, %v655
        %v657 = vrot.slane %v656, 1
        %v658 = vmax.f32 %v656, %v657
        %v659 = vrot.slane %v616, 4
        %v660 = vmax.f32 %v616, %v659
        %v661 = vrot.slane %v660, 2
        %v662 = vmax.f32 %v660, %v661
        %v663 = vrot.slane %v662, 1
        %v664 = vmax.f32 %v662, %v663
        %v665 = vsub.f32 %v609, %v622
        %v666 = vsub.f32 %v610, %v628
        %v667 = vsub.f32 %v611, %v634
        %v668 = vsub.f32 %v612, %v640
        %v669 = vsub.f32 %v613, %v646
        %v670 = vsub.f32 %v614, %v652
        %v671 = vsub.f32 %v615, %v658
        %v672 = vsub.f32 %v616, %v664
        %v673 = vmul.f32 %v665, 1.442695
        %v674 = vpow.pop %v673
        %v675 = vmul.f32 %v666, 1.442695
        %v676 = vpow.pop %v675
        %v677 = vmul.f32 %v667, 1.442695
        %v678 = vpow.pop %v677
        %v679 = vmul.f32 %v668, 1.442695
        %v680 = vpow.pop %v679
        %v681 = vmul.f32 %v669, 1.442695
        %v682 = vpow.pop %v681
        %v683 = vmul.f32 %v670, 1.442695
        %v684 = vpow.pop %v683
        %v685 = vmul.f32 %v671, 1.442695
        %v686 = vpow.pop %v685
        %v687 = vmul.f32 %v672, 1.442695
        %v688 = vpow.pop %v687
        %v689 = vrot.slane %v674, 4
        %v690 = vadd.f32 %v674, %v689
        %v691 = vrot.slane %v690, 2
        %v692 = vadd.f32 %v690, %v691
        %v693 = vrot.slane %v692, 1
        %v694 = vadd.f32 %v692, %v693
        %v695 = vrot.slane %v676, 4
        %v696 = vadd.f32 %v676, %v695
        %v697 = vrot.slane %v696, 2
        %v698 = vadd.f32 %v696, %v697
        %v699 = vrot.slane %v698, 1
        %v700 = vadd.f32 %v698, %v699
        %v701 = vrot.slane %v678, 4
        %v702 = vadd.f32 %v678, %v701
        %v703 = vrot.slane %v702, 2
        %v704 = vadd.f32 %v702, %v703
        %v705 = vrot.slane %v704, 1
        %v706 = vadd.f32 %v704, %v705
        %v707 = vrot.slane %v680, 4
        %v708 = vadd.f32 %v680, %v707
        %v709 = vrot.slane %v708, 2
        %v710 = vadd.f32 %v708, %v709
        %v711 = vrot.slane %v710, 1
        %v712 = vadd.f32 %v710, %v711
        %v713 = vrot.slane %v682, 4
        %v714 = vadd.f32 %v682, %v713
        %v715 = vrot.slane %v714, 2
        %v716 = vadd.f32 %v714, %v715
        %v717 = vrot.slane %v716, 1
        %v718 = vadd.f32 %v716, %v717
        %v719 = vrot.slane %v684, 4
        %v720 = vadd.f32 %v684, %v719
        %v721 = vrot.slane %v720, 2
        %v722 = vadd.f32 %v720, %v721
        %v723 = vrot.slane %v722, 1
        %v724 = vadd.f32 %v722, %v723
        %v725 = vrot.slane %v686, 4
        %v726 = vadd.f32 %v686, %v725
        %v727 = vrot.slane %v726, 2
        %v728 = vadd.f32 %v726, %v727
        %v729 = vrot.slane %v728, 1
        %v730 = vadd.f32 %v728, %v729
        %v731 = vrot.slane %v688, 4
        %v732 = vadd.f32 %v688, %v731
        %v733 = vrot.slane %v732, 2
        %v734 = vadd.f32 %v732, %v733
        %v735 = vrot.slane %v734, 1
        %v736 = vadd.f32 %v734, %v735
        %v737 = vrcp.pop %v694
        %v738 = vrcp.pop %v700
        %v739 = vrcp.pop %v706
        %v740 = vrcp.pop %v712
        %v741 = vrcp.pop %v718
        %v742 = vrcp.pop %v724
        %v743 = vrcp.pop %v730
        %v744 = vrcp.pop %v736
        %v745 = vmul.f32 %v674, %v737
        %v746 = vmul.f32 %v676, %v738
        %v747 = vmul.f32 %v678, %v739
        %v748 = vmul.f32 %v680, %v740
        %v749 = vmul.f32 %v682, %v741
        %v750 = vmul.f32 %v684, %v742
        %v751 = vmul.f32 %v686, %v743
        %v752 = vmul.f32 %v688, %v744
        %v753 = vpack.c.bf16 %v746, %v745
        %v754 = vpack.c.bf16 %v748, %v747
        %v755 = vpack.c.bf16 %v750, %v749
        %v756 = vpack.c.bf16 %v752, %v751
        %v757 = vld [vmem:[#allocation5] sm:$0xf]
        %v758 = vld [vmem:[#allocation5 + $0x4] sm:$0xf]
        %v759 = vld [vmem:[#allocation5 + $0x8] sm:$0xf]
        %v760 = vld [vmem:[#allocation5 + $0xc] sm:$0xf]
        %v761 = vld [vmem:[#allocation5 + $0x10] sm:$0xf]
        %v762 = vld [vmem:[#allocation5 + $0x14] sm:$0xf]
        %v763 = vld [vmem:[#allocation5 + $0x18] sm:$0xf]
        %v764 = vld [vmem:[#allocation5 + $0x1c] sm:$0xf]
        %v765 = vld [vmem:[#allocation5 + $0x20] sm:$0xf]
        %v766 = vld [vmem:[#allocation5 + $0x24] sm:$0xf]
        %v767 = vld [vmem:[#allocation5 + $0x28] sm:$0xf]
        %v768 = vld [vmem:[#allocation5 + $0x2c] sm:$0xf]
        %v769 = vld [vmem:[#allocation5 + $0x30] sm:$0xf]
        %v770 = vld [vmem:[#allocation5 + $0x34] sm:$0xf]
        %v771 = vld [vmem:[#allocation5 + $0x38] sm:$0xf]
        %v772 = vld [vmem:[#allocation5 + $0x3c] sm:$0xf]
        %v789 = vunpack.c.l.b16 %v757
        %v790 = vunpack.c.l.b16 %v758
        %v791 = vunpack.c.l.b16 %v759
        %v792 = vunpack.c.l.b16 %v760
        %v793 = vunpack.c.l.b16 %v761
        %v794 = vunpack.c.l.b16 %v762
        %v795 = vunpack.c.l.b16 %v763
        %v796 = vunpack.c.l.b16 %v764
        %v797 = vunpack.c.l.b16 %v765
        %v798 = vunpack.c.l.b16 %v766
        %v799 = vunpack.c.l.b16 %v767
        %v800 = vunpack.c.l.b16 %v768
        %v801 = vunpack.c.l.b16 %v769
        %v802 = vunpack.c.l.b16 %v770
        %v803 = vunpack.c.l.b16 %v771
        %v804 = vunpack.c.l.b16 %v772
        %v805 = vpack.c.b16 %v790, %v789
        %v806 = vpack.c.b16 %v792, %v791
        %v807 = vpack.c.b16 %v794, %v793
        %v808 = vpack.c.b16 %v796, %v795
        %v809 = vpack.c.b16 %v798, %v797
        %v810 = vpack.c.b16 %v800, %v799
        %v811 = vpack.c.b16 %v802, %v801
        %v812 = vpack.c.b16 %v804, %v803
        %821 = vmatprep.subr.bf16.mxu0 0
        %822 = vmatpush1.bf16.msra.mxu0 %v812
        %823 = vmatprep.subr.bf16.mxu0 0
        %824 = vmatpush1.bf16.msra.mxu0 %v811
        %825 = vmatprep.subr.bf16.mxu0 0
        %826 = vmatpush1.bf16.msra.mxu0 %v810
        %827 = vmatprep.subr.bf16.mxu0 0
        %828 = vmatpush1.bf16.msra.mxu0 %v809
        %829 = vmatprep.subr.bf16.mxu0 0
        %830 = vmatpush1.bf16.msra.mxu0 %v808
        %831 = vmatprep.subr.bf16.mxu0 0
        %832 = vmatpush1.bf16.msra.mxu0 %v807
        %833 = vmatprep.subr.bf16.mxu0 0
        %834 = vmatpush1.bf16.msra.mxu0 %v806
        %835 = vmatprep.subr.bf16.mxu0 0
        %836 = vmatpush1.bf16.msra.mxu0 %v805
        %837 = vmatprep.subr.bf16.mxu0 0
        %838 = vmatpush2.bf16.msra.mxu0 0
        %839 = vmatprep.subr.bf16.mxu0 0
        %840 = vmatpush2.bf16.msra.mxu0 0
        %841 = vmatprep.subr.bf16.mxu0 0
        %842 = vmatpush2.bf16.msra.mxu0 0
        %843 = vmatprep.subr.bf16.mxu0 0
        %844 = vmatpush2.bf16.msra.mxu0 0
        %845 = vmatprep.subr.bf16.mxu0 0
        %846 = vmatpush2.bf16.msra.mxu0 0
        %847 = vmatprep.subr.bf16.mxu0 0
        %848 = vmatpush2.bf16.msra.mxu0 0
        %849 = vmatprep.subr.bf16.mxu0 0
        %850 = vmatpush2.bf16.msra.mxu0 0
        %851 = vmatprep.subr.bf16.mxu0 0
        %852 = vmatpush2.bf16.msra.mxu0 0
        %853 = vmatprep.mubr.bf16.mxu0 0
        %854 = vmatmul.mubr.bf16.gmra.mxu0 %v753
        %v855 = vpop.f32.mrf.mxu0
        %v856 = vadd.f32 0.0, %v855
        %v857 = vpop.f32.mrf.mxu0
        %v858 = vpop.f32.mrf.mxu0
        %v859 = vadd.f32 0.0, %v858
        %v860 = vpop.f32.mrf.mxu0
        %861 = vmatprep.mubr.bf16.mxu0 0
        %862 = vmatmul.mubr.bf16.gmra.mxu0 %v754
        %v863 = vpop.f32.mrf.mxu0
        %v864 = vadd.f32 0.0, %v863
        %v865 = vpop.f32.mrf.mxu0
        %v866 = vpop.f32.mrf.mxu0
        %v867 = vadd.f32 0.0, %v866
        %v868 = vpop.f32.mrf.mxu0
        %869 = vmatprep.mubr.bf16.mxu0 0
        %870 = vmatmul.mubr.bf16.gmra.mxu0 %v755
        %v871 = vpop.f32.mrf.mxu0
        %v872 = vadd.f32 0.0, %v871
        %v873 = vpop.f32.mrf.mxu0
        %v874 = vpop.f32.mrf.mxu0
        %v875 = vadd.f32 0.0, %v874
        %v876 = vpop.f32.mrf.mxu0
        %877 = vmatprep.mubr.bf16.mxu0 0
        %878 = vmatmul.mubr.bf16.gmra.mxu0 %v756
        %v879 = vpop.f32.mrf.mxu0
        %v880 = vadd.f32 0.0, %v879
        %v881 = vpop.f32.mrf.mxu0
        %v882 = vpop.f32.mrf.mxu0
        %v883 = vadd.f32 0.0, %v882
        %v884 = vpop.f32.mrf.mxu0
        %885 = vdwg.mxu0
        %v886 = vmul.f32 %v856, %v459
        %v887 = vmul.f32 %v859, %v463
        %v888 = vmul.f32 %v864, %v469
        %v889 = vmul.f32 %v867, %v473
        %v890 = vmul.f32 %v872, %v479
        %v891 = vmul.f32 %v875, %v483
        %v892 = vmul.f32 %v880, %v489
        %v893 = vmul.f32 %v883, %v493
        %v894 = vrot.slane %v886, 4
        %v895 = vadd.f32 %v886, %v894
        %v896 = vrot.slane %v895, 2
        %v897 = vadd.f32 %v895, %v896
        %v898 = vrot.slane %v897, 1
        %v899 = vadd.f32 %v897, %v898
        %v900 = vrot.slane %v887, 4
        %v901 = vadd.f32 %v887, %v900
        %v902 = vrot.slane %v901, 2
        %v903 = vadd.f32 %v901, %v902
        %v904 = vrot.slane %v903, 1
        %v905 = vadd.f32 %v903, %v904
        %v906 = vrot.slane %v888, 4
        %v907 = vadd.f32 %v888, %v906
        %v908 = vrot.slane %v907, 2
        %v909 = vadd.f32 %v907, %v908
        %v910 = vrot.slane %v909, 1
        %v911 = vadd.f32 %v909, %v910
        %v912 = vrot.slane %v889, 4
        %v913 = vadd.f32 %v889, %v912
        %v914 = vrot.slane %v913, 2
        %v915 = vadd.f32 %v913, %v914
        %v916 = vrot.slane %v915, 1
        %v917 = vadd.f32 %v915, %v916
        %v918 = vrot.slane %v890, 4
        %v919 = vadd.f32 %v890, %v918
        %v920 = vrot.slane %v919, 2
        %v921 = vadd.f32 %v919, %v920
        %v922 = vrot.slane %v921, 1
        %v923 = vadd.f32 %v921, %v922
        %v924 = vrot.slane %v891, 4
        %v925 = vadd.f32 %v891, %v924
        %v926 = vrot.slane %v925, 2
        %v927 = vadd.f32 %v925, %v926
        %v928 = vrot.slane %v927, 1
        %v929 = vadd.f32 %v927, %v928
        %v930 = vrot.slane %v892, 4
        %v931 = vadd.f32 %v892, %v930
        %v932 = vrot.slane %v931, 2
        %v933 = vadd.f32 %v931, %v932
        %v934 = vrot.slane %v933, 1
        %v935 = vadd.f32 %v933, %v934
        %v936 = vrot.slane %v893, 4
        %v937 = vadd.f32 %v893, %v936
        %v938 = vrot.slane %v937, 2
        %v939 = vadd.f32 %v937, %v938
        %v940 = vrot.slane %v939, 1
        %v941 = vadd.f32 %v939, %v940
        %v942 = vpack.c.bf16 %v899, %v899
        %v943 = vpack.c.bf16 %v905, %v905
        %v944 = vpack.c.bf16 %v911, %v911
        %v945 = vpack.c.bf16 %v917, %v917
        %v946 = vpack.c.bf16 %v923, %v923
        %v947 = vpack.c.bf16 %v929, %v929
        %v948 = vpack.c.bf16 %v935, %v935
        %v949 = vpack.c.bf16 %v941, %v941
        %v950 = vld [vmem:[#allocation7] sm:$0xf]
        %v951 = vld [vmem:[#allocation7 + $0x4] sm:$0xf]
        %v952 = vld [vmem:[#allocation7 + $0x8] sm:$0xf]
        %v953 = vld [vmem:[#allocation7 + $0xc] sm:$0xf]
        %v954 = vld [vmem:[#allocation7 + $0x10] sm:$0xf]
        %v955 = vld [vmem:[#allocation7 + $0x14] sm:$0xf]
        %v956 = vld [vmem:[#allocation7 + $0x18] sm:$0xf]
        %v957 = vld [vmem:[#allocation7 + $0x1c] sm:$0xf]
        %v958 = vld [vmem:[#allocation7 + $0x20] sm:$0xf]
        %v959 = vld [vmem:[#allocation7 + $0x24] sm:$0xf]
        %v960 = vld [vmem:[#allocation7 + $0x28] sm:$0xf]
        %v961 = vld [vmem:[#allocation7 + $0x2c] sm:$0xf]
        %v962 = vld [vmem:[#allocation7 + $0x30] sm:$0xf]
        %v963 = vld [vmem:[#allocation7 + $0x34] sm:$0xf]
        %v964 = vld [vmem:[#allocation7 + $0x38] sm:$0xf]
        %v965 = vld [vmem:[#allocation7 + $0x3c] sm:$0xf]
        %v974 = vunpack.c.l.b16 %v942
        %v975 = vunpack.c.l.b16 %v943
        %v976 = vunpack.c.l.b16 %v944
        %v977 = vunpack.c.l.b16 %v945
        %v978 = vunpack.c.l.b16 %v946
        %v979 = vunpack.c.l.b16 %v947
        %v980 = vunpack.c.l.b16 %v948
        %v981 = vunpack.c.l.b16 %v949
        %vm982 = vcmask 1041409
        %v983 = vsel %vm982, %v975, %v974
        %vm984 = vcmask 1042434
        %v985 = vsel %vm984, %v976, %v983
        %vm986 = vcmask 1043459
        %v987 = vsel %vm986, %v977, %v985
        %vm988 = vcmask 1044484
        %v989 = vsel %vm988, %v978, %v987
        %vm990 = vcmask 1045509
        %v991 = vsel %vm990, %v979, %v989
        %vm992 = vcmask 1046534
        %v993 = vsel %vm992, %v980, %v991
        %vm994 = vcmask 1047559
        %v995 = vsel %vm994, %v981, %v993
        %v996 = vpack.c.b16 %v995, %v995
        %v1014 = vunpack.c.l.b16 %v950
        %v1015 = vunpack.c.l.b16 %v951
        %v1016 = vunpack.c.l.b16 %v952
        %v1017 = vunpack.c.l.b16 %v953
        %v1018 = vunpack.c.l.b16 %v954
        %v1019 = vunpack.c.l.b16 %v955
        %v1020 = vunpack.c.l.b16 %v956
        %v1021 = vunpack.c.l.b16 %v957
        %v1022 = vunpack.c.l.b16 %v958
        %v1023 = vunpack.c.l.b16 %v959
        %v1024 = vunpack.c.l.b16 %v960
        %v1025 = vunpack.c.l.b16 %v961
        %v1026 = vunpack.c.l.b16 %v962
        %v1027 = vunpack.c.l.b16 %v963
        %v1028 = vunpack.c.l.b16 %v964
        %v1029 = vunpack.c.l.b16 %v965
        %v1030 = vpack.c.b16 %v1015, %v1014
        %v1031 = vpack.c.b16 %v1017, %v1016
        %v1032 = vpack.c.b16 %v1019, %v1018
        %v1033 = vpack.c.b16 %v1021, %v1020
        %v1034 = vpack.c.b16 %v1023, %v1022
        %v1035 = vpack.c.b16 %v1025, %v1024
        %v1036 = vpack.c.b16 %v1027, %v1026
        %v1037 = vpack.c.b16 %v1029, %v1028
        %1046 = vmatprep.subr.bf16.mxu0 0
        %1047 = vmatpush1.bf16.msra.mxu0 %v1037
        %1048 = vmatprep.subr.bf16.mxu0 0
        %1049 = vmatpush1.bf16.msra.mxu0 %v1036
        %1050 = vmatprep.subr.bf16.mxu0 0
        %1051 = vmatpush1.bf16.msra.mxu0 %v1035
        %1052 = vmatprep.subr.bf16.mxu0 0
        %1053 = vmatpush1.bf16.msra.mxu0 %v1034
        %1054 = vmatprep.subr.bf16.mxu0 0
        %1055 = vmatpush1.bf16.msra.mxu0 %v1033
        %1056 = vmatprep.subr.bf16.mxu0 0
        %1057 = vmatpush1.bf16.msra.mxu0 %v1032
        %1058 = vmatprep.subr.bf16.mxu0 0
        %1059 = vmatpush1.bf16.msra.mxu0 %v1031
        %1060 = vmatprep.subr.bf16.mxu0 0
        %1061 = vmatpush1.bf16.msra.mxu0 %v1030
        %1062 = vmatprep.subr.bf16.mxu0 0
        %1063 = vmatpush2.bf16.msra.mxu0 0
        %1064 = vmatprep.subr.bf16.mxu0 0
        %1065 = vmatpush2.bf16.msra.mxu0 0
        %1066 = vmatprep.subr.bf16.mxu0 0
        %1067 = vmatpush2.bf16.msra.mxu0 0
        %1068 = vmatprep.subr.bf16.mxu0 0
        %1069 = vmatpush2.bf16.msra.mxu0 0
        %1070 = vmatprep.subr.bf16.mxu0 0
        %1071 = vmatpush2.bf16.msra.mxu0 0
        %1072 = vmatprep.subr.bf16.mxu0 0
        %1073 = vmatpush2.bf16.msra.mxu0 0
        %1074 = vmatprep.subr.bf16.mxu0 0
        %1075 = vmatpush2.bf16.msra.mxu0 0
        %1076 = vmatprep.subr.bf16.mxu0 0
        %1077 = vmatpush2.bf16.msra.mxu0 0
        %1078 = vmatprep.mubr.bf16.mxu0 0
        %1079 = vmatmul.mubr.bf16.gmra.mxu0 %v996
        %v1080 = vpop.f32.mrf.mxu0
        %v1081 = vadd.f32 0.0, %v1080
        %v1082 = vpop.f32.mrf.mxu0
        %v1083 = vpop.f32.mrf.mxu0
        %v1084 = vpop.f32.mrf.mxu0
        %1085 = vdwg.mxu0
        %1086 = vst [vmem:[%s287] sm:$0xff] %v1081
        %s1087 = sand.u32 %s146, 1
        %s1088 = scalar_lea.sflag [#allocation4], %s1087
        %s1089 = sand.u32 %s146, 1
        %s1090 = smul.addr %s1089, 8
        %s1091 = scalar_lea.vmem [#allocation8], %s1090
        // Predicated region
        $region53: #{tpu_custom_call.1} parent=39 // pred_check
          %p1092 = pneg %p156
        $region54: #{tpu_custom_call.1} parent=39 // pred_check_branch
          %1094 = sbr.rel (%p1092) target = $region56
        $region55: #{tpu_custom_call.1} parent=39 // pred_region
          %s1096 = ssub.s32 128, 128
          %1097 = vsyncadd %s1088, %s1096
          %s1098 = smul.addr %s23, 128
          %s1099 = scalar_lea.hbm %s5, %s1098
          %s1101 = sshll.u32 %s1091, 4
          %s1102 = int_to_ptr.vmem [resolvable:$true] %s1101
          %1104 = dma.vmem_to_hbm [thread:$0]  %s1102, 128, %s1099, %s1088
        $region56: #{tpu_custom_call.1} parent=39 // pred_fallthru
          _
      $region40: #{tpu_custom_call.1} parent=5 // pred_fallthru
        _
      %p1105 = scmp.le.s32.totalorder 2, %s18
      // Predicated region
      $region57: #{tpu_custom_call.1} parent=5 // pred_check
        %p1106 = pneg %p1105
      $region58: #{tpu_custom_call.1} parent=5 // pred_check_branch
        %1108 = sbr.rel (%p1106) target = $region60
      $region59: #{tpu_custom_call.1} parent=5 // pred_region
        %s1109 = ssub.s32 %s18, 2
        // Predicated region
        $region61: #{tpu_custom_call.1} parent=59 // pred_check
          %p1110 = pneg %p162
        $region62: #{tpu_custom_call.1} parent=59 // pred_check_branch
          %1112 = sbr.rel (%p1110) target = $region64
        $region63: #{tpu_custom_call.1} parent=59 // pred_region
          %s1113 = sand.u32 %s147, 1
          %s1114 = scalar_lea.sflag [#allocation4], %s1113
          %s1115 = sand.u32 %s147, 1
          %s1116 = smul.addr %s1115, 8
          %s1117 = scalar_lea.vmem [#allocation8], %s1116
          %1118 = dma.done %s1114, 128
        $region64: #{tpu_custom_call.1} parent=59 // pred_fallthru
          _
      $region60: #{tpu_custom_call.1} parent=5 // pred_fallthru
        _
    $region6: #{tpu_custom_call.1} parent=1 // loop_footer
      %s22 = sadd.s32 1, %s18
    $region7: #{tpu_custom_call.1} parent=1 // loop_footer_branch
      %17 = sbr.rel target = $region3
    $region8: #{tpu_custom_call.1} parent=1 // loop_exit
      _
    %1119 = vsyncpa [#allocation3], 1
    %s1120 = scalar_lea.sflag [#allocation3], 1
    %1121 = vsyncpa %s1120, 1
    %1122 = vsyncpa [#allocation6], 1
    %1123 = vsyncpa [#allocation4], 1
    %s1124 = scalar_lea.sflag [#allocation4], 1
    %1125 = vsyncpa %s1124, 1

</llo_original>
